<compile_context>
chip_gen: v5e
topology: v5e:2x2
jax: 0.10.0
libtpu: 0.0.40
codegen_flags: <defaults>
</compile_context>

<pallas_src>
import jax
import jax.numpy as jnp
from jax.experimental import pallas as pl
from jax.experimental.pallas import tpu as pltpu

INPUT_SIZE = 784
HIDDEN1 = 70
HIDDEN2 = 35
NUM_CLASSES = 10
BN_EPS = 1e-5

# Lane-padded sizes (multiples of 128).
IN_PAD = 896    # 7 * 128 -> no ragged K tile on the MXU
H1_PAD = 128
H2_PAD = 128
OUT_PAD = 128


def _bn_relu_train(h, gamma, beta, group, bt):
    """Per-mini-batch training-mode BatchNorm1d folded to one scale/shift pass, then ReLU.

    h: (group*bt, F) f32 pre-activations for `group` independent mini-batches of `bt` rows each.
    One reduction pass gives sum(h) and sum(h*h) (lane-concatenated), biased variance, all f32.
    Zero-padded feature lanes stay exactly zero (gamma is padded with 0).
    """
    feat = h.shape[-1]
    h3 = h.reshape(group, bt, feat)
    # Single fused reduce over the batch axis for both moments.
    stats = jnp.mean(jnp.concatenate([h3, h3 * h3], axis=-1), axis=1)   # (group, 2*feat)
    mu = stats[:, None, :feat]                                           # (group, 1, feat)
    var = jnp.maximum(stats[:, None, feat:] - mu * mu, 0.0)
    scale = gamma * jax.lax.rsqrt(var + BN_EPS)                          # (group, 1, feat)
    shift = beta - mu * scale
    return jnp.maximum(h3 * scale + shift, 0.0).reshape(group * bt, feat)


def _make_kernel(group, bt):
    def kernel(x_ref,
               w1_ref, g1_ref, be1_ref,
               w2_ref, g2_ref, be2_ref,
               w3_ref, b3_ref,
               out_ref):
        # fc1 -> bn1 -> relu  (bf16 x bf16 -> f32 on the MXU; fc1 bias cancelled by BN)
        h = jnp.dot(x_ref[...], w1_ref[...], preferred_element_type=jnp.float32)
        h = _bn_relu_train(h, g1_ref[...], be1_ref[...], group, bt)

        # fc2 -> bn2 -> relu  (fc2 bias dropped, same reason)
        h = jnp.dot(h.astype(jnp.bfloat16), w2_ref[...], preferred_element_type=jnp.float32)
        h = _bn_relu_train(h, g2_ref[...], be2_ref[...], group, bt)

        # fc3 (keeps its bias)
        out_ref[...] = jnp.dot(h.astype(jnp.bfloat16), w3_ref[...],
                               preferred_element_type=jnp.float32) + b3_ref[...]
    return kernel


def init_params(key):
    """Deterministic synthetic init; natural (in, out) layout, f32, PyTorch-like bounds."""
    ks = jax.random.split(key, 6)

    def linear(kw, kb, fan_in, fan_out):
        bound = 1.0 / jnp.sqrt(float(fan_in))
        w = jax.random.uniform(kw, (fan_in, fan_out), jnp.float32, -bound, bound)
        b = jax.random.uniform(kb, (1, fan_out), jnp.float32, -bound, bound)
        return w, b

    w1, b1 = linear(ks[0], ks[1], INPUT_SIZE, HIDDEN1)
    w2, b2 = linear(ks[2], ks[3], HIDDEN1, HIDDEN2)
    w3, b3 = linear(ks[4], ks[5], HIDDEN2, NUM_CLASSES)
    return {
        "w1": w1, "b1": b1,
        "g1": jnp.ones((1, HIDDEN1), jnp.float32), "be1": jnp.zeros((1, HIDDEN1), jnp.float32),
        "w2": w2, "b2": b2,
        "g2": jnp.ones((1, HIDDEN2), jnp.float32), "be2": jnp.zeros((1, HIDDEN2), jnp.float32),
        "w3": w3, "b3": b3,
    }


def pack_params(params):
    """Pad to lane-dense shapes; weights in bf16 (native MXU dtype, halves weight DMA),
    BN affine and the final bias in f32.  gamma is padded with 0.0 so padded lanes are
    hard-zeroed by the BN scale.  fc1/fc2 biases are intentionally not packed (a constant
    bias before training-mode BN is a no-op)."""
    def pad2(w, r, c):
        return jnp.pad(w, ((0, r - w.shape[0]), (0, c - w.shape[1])))

    def pad_row(v, c):
        return jnp.pad(v, ((0, 0), (0, c - v.shape[1])))

    return {
        "w1": pad2(params["w1"], IN_PAD, H1_PAD).astype(jnp.bfloat16),
        "g1": pad_row(params["g1"], H1_PAD),
        "be1": pad_row(params["be1"], H1_PAD),
        "w2": pad2(params["w2"], H1_PAD, H2_PAD).astype(jnp.bfloat16),
        "g2": pad_row(params["g2"], H2_PAD),
        "be2": pad_row(params["be2"], H2_PAD),
        "w3": pad2(params["w3"], H2_PAD, OUT_PAD).astype(jnp.bfloat16),
        "b3": pad_row(params["b3"], OUT_PAD),
    }


def _choose_group(num_batches, bt, target_rows):
    """Largest divisor G of num_batches with G*bt <= target_rows and (if possible) grid >= 2."""
    best = 1
    for g in range(1, num_batches + 1):
        if num_batches % g:
            continue
        if g * bt > target_rows:
            break
        if num_batches >= 2 and num_batches // g < 2:
            break   # keep >= 2 grid steps so ("parallel",) can use both v7x TensorCores
        best = g
    return best


def neuralnet_forward(x, packed, *, group=None, target_rows=2048):
    """Forward pass.

    x: (B, 784) for one mini-batch, or (num_batches, B, 784) for many mini-batches in a single
       kernel launch.  `group` mini-batches are processed per grid step (BN statistics are still
       per mini-batch, i.e. one module.forward call per mini-batch).  Weights are DMA'd once
       (constant index_maps) and stay VMEM-resident across grid steps.
    target_rows=2048 keeps the double-buffered bf16 x tile (~3.6 MB) + resident weights well
    inside v7x's 64 MiB VMEM / 32 MiB default scoped limit; v5e/v6e have more headroom.
    Returns f32 logits of shape (..., 10).
    """
    squeeze = (x.ndim == 2)
    if squeeze:
        x = x[None]
    num_batches, bt, in_features = x.shape
    assert in_features == INPUT_SIZE
    assert bt % 8 == 0, "per-mini-batch size must be a multiple of 8"

    if group is None:
        group = _choose_group(num_batches, bt, target_rows)
    assert num_batches % group == 0
    grid_len = num_batches // group
    rows_per_step = group * bt
    total_rows = num_batches * bt

    # Single fused pass: cast to bf16 and lane-pad 784 -> 896 (no separate f32 pad of x).
    # In a real pipeline this packing is done once, outside the per-step path.
    xp = jnp.pad(x.astype(jnp.bfloat16), ((0, 0), (0, 0), (0, IN_PAD - INPUT_SIZE)))
    xp = xp.reshape(total_rows, IN_PAD)

    def const(shape):
        return pl.BlockSpec(shape, lambda i: (0, 0))   # VMEM-resident across grid steps

    weight_bytes = sum(int(v.size) * v.dtype.itemsize for v in packed.values())
    cost = pl.CostEstimate(
        flops=int(2 * total_rows * (IN_PAD * H1_PAD + H1_PAD * H2_PAD + H2_PAD * OUT_PAD)),
        transcendentals=int(num_batches * (H1_PAD + H2_PAD)),   # rsqrt per mini-batch per feature
        bytes_accessed=int(xp.size * xp.dtype.itemsize + total_rows * OUT_PAD * 4 + weight_bytes),
    )

    out = pl.pallas_call(
        _make_kernel(group, bt),
        out_shape=jax.ShapeDtypeStruct((total_rows, OUT_PAD), jnp.float32),
        grid=(grid_len,),
        in_specs=[
            pl.BlockSpec((rows_per_step, IN_PAD), lambda i: (i, 0)),   # x tile per grid step
            const((IN_PAD, H1_PAD)), const((1, H1_PAD)), const((1, H1_PAD)),
            const((H1_PAD, H2_PAD)), const((1, H2_PAD)), const((1, H2_PAD)),
            const((H2_PAD, OUT_PAD)), const((1, OUT_PAD)),
        ],
        out_specs=pl.BlockSpec((rows_per_step, OUT_PAD), lambda i: (i, 0)),  # lane-dense stores
        compiler_params=pltpu.CompilerParams(
            dimension_semantics=("parallel",)),
        cost_estimate=cost,
    )(xp,
      packed["w1"], packed["g1"], packed["be1"],
      packed["w2"], packed["g2"], packed["be2"],
      packed["w3"], packed["b3"])

    out = out.reshape(num_batches, bt, OUT_PAD)[:, :, :NUM_CLASSES]
    return out[0] if squeeze else out


def _reference_forward(x, p):
    """Pure-JAX reference with the original module's semantics (biases included, training-mode BN
    with two-pass variance), emulating the kernel's storage precision (bf16 weights and bf16
    matmul inputs, f32 accumulation) so the comparison tolerance stays meaningful."""
    bf = lambda a: a.astype(jnp.bfloat16)
    hi = jax.lax.Precision.HIGHEST

    def bn(h, g, b):
        mu = jnp.mean(h, axis=0, keepdims=True)
        var = jnp.mean((h - mu) ** 2, axis=0, keepdims=True)
        return (h - mu) / jnp.sqrt(var + BN_EPS) * g + b

    h = jnp.dot(bf(x), bf(p["w1"]), precision=hi, preferred_element_type=jnp.float32) + p["b1"]
    h = jnp.maximum(bn(h, p["g1"], p["be1"]), 0.0)
    h = jnp.dot(bf(h), bf(p["w2"]), precision=hi, preferred_element_type=jnp.float32) + p["b2"]
    h = jnp.maximum(bn(h, p["g2"], p["be2"]), 0.0)
    return jnp.dot(bf(h), bf(p["w3"]), precision=hi, preferred_element_type=jnp.float32) + p["b3"]


if __name__ == "__main__":
    key = jax.random.PRNGKey(0)
    k_x, k_p = jax.random.split(key)

    params = init_params(k_p)
    packed = pack_params(params)

    # Case 1: two mini-batches of 32 in one launch (group=1 -> grid=(2,), megacore-friendly).
    num_batches, bt = 2, 32
    x = jax.random.normal(k_x, (num_batches, bt, INPUT_SIZE), dtype=jnp.float32)
    out = jax.block_until_ready(neuralnet_forward(x, packed))
    assert out.shape == (num_batches, bt, NUM_CLASSES)
    ref = jnp.stack([_reference_forward(x[i], params) for i in range(num_batches)])
    assert jnp.allclose(out, ref, atol=2e-2, rtol=2e-2), \
        f"max abs err = {float(jnp.max(jnp.abs(out - ref)))}"

    # Case 2: single 2-D mini-batch path.
    out1 = jax.block_until_ready(neuralnet_forward(x[0], packed))
    assert out1.shape == (bt, NUM_CLASSES)
    assert jnp.allclose(out1, ref[0], atol=2e-2, rtol=2e-2)

    # Case 3: aggregated path — 4 mini-batches of 16, two per grid step (grid=(2,)); the kernel
    # computes per-mini-batch BN statistics via the (G, bt, F) reshape.
    nb2, bt2 = 4, 16
    x2 = jax.random.normal(jax.random.fold_in(k_x, 1), (nb2, bt2, INPUT_SIZE), dtype=jnp.float32)
    out2 = jax.block_until_ready(neuralnet_forward(x2, packed, group=2))
    assert out2.shape == (nb2, bt2, NUM_CLASSES)
    ref2 = jnp.stack([_reference_forward(x2[i], params) for i in range(nb2)])
    assert jnp.allclose(out2, ref2, atol=2e-2, rtol=2e-2), \
        f"max abs err (grouped) = {float(jnp.max(jnp.abs(out2 - ref2)))}"

    print("KERNEL_OK")
</pallas_src>

<mosaic_0001>
module attributes {stable_mosaic.version = 11 : i64} {
  func.func @kernel(%arg0: i32, %arg1: memref<32x896xbf16, #tpu.memory_space<vmem>>, %arg2: memref<896x128xbf16, #tpu.memory_space<vmem>>, %arg3: memref<1x128xf32, #tpu.memory_space<vmem>>, %arg4: memref<1x128xf32, #tpu.memory_space<vmem>>, %arg5: memref<128x128xbf16, #tpu.memory_space<vmem>>, %arg6: memref<1x128xf32, #tpu.memory_space<vmem>>, %arg7: memref<1x128xf32, #tpu.memory_space<vmem>>, %arg8: memref<128x128xbf16, #tpu.memory_space<vmem>>, %arg9: memref<1x128xf32, #tpu.memory_space<vmem>>, %arg10: memref<32x128xf32, #tpu.memory_space<vmem>>) attributes {dimension_semantics = [#tpu.dimension_semantics<parallel>], iteration_bounds = array<i64: 2>, scalar_prefetch = 0 : i64, scratch_operands = 0 : i64, tpu.core_type = #tpu.core_type<tc>, window_params = [{transform_indices = @transform_0, window_bounds = array<i64: 32, 896>}, {pipeline_mode = #tpu.pipeline_mode<synchronous>, transform_indices = @transform_1, window_bounds = array<i64: 896, 128>}, {pipeline_mode = #tpu.pipeline_mode<synchronous>, transform_indices = @transform_2, window_bounds = array<i64: 1, 128>}, {pipeline_mode = #tpu.pipeline_mode<synchronous>, transform_indices = @transform_3, window_bounds = array<i64: 1, 128>}, {pipeline_mode = #tpu.pipeline_mode<synchronous>, transform_indices = @transform_4, window_bounds = array<i64: 128, 128>}, {pipeline_mode = #tpu.pipeline_mode<synchronous>, transform_indices = @transform_5, window_bounds = array<i64: 1, 128>}, {pipeline_mode = #tpu.pipeline_mode<synchronous>, transform_indices = @transform_6, window_bounds = array<i64: 1, 128>}, {pipeline_mode = #tpu.pipeline_mode<synchronous>, transform_indices = @transform_7, window_bounds = array<i64: 128, 128>}, {pipeline_mode = #tpu.pipeline_mode<synchronous>, transform_indices = @transform_8, window_bounds = array<i64: 1, 128>}, {transform_indices = @transform_9, window_bounds = array<i64: 32, 128>}]} {
    %c0 = arith.constant 0 : index
    %c0_0 = arith.constant 0 : index
    %0 = vector.load %arg1[%c0, %c0_0] : memref<32x896xbf16, #tpu.memory_space<vmem>>, vector<32x896xbf16>
    %c0_1 = arith.constant 0 : index
    %c0_2 = arith.constant 0 : index
    %1 = vector.load %arg2[%c0_1, %c0_2] : memref<896x128xbf16, #tpu.memory_space<vmem>>, vector<896x128xbf16>
    %cst = arith.constant dense<0.000000e+00> : vector<32x128xf32>
    %2 = tpu.matmul %0, %1, %cst {dimension_numbers = #tpu.dot_dimension_numbers<[1], [0], [0], [1], [0, 0, 1, 1], [], []>} : vector<32x896xbf16>, vector<896x128xbf16>, vector<32x128xf32> -> vector<32x128xf32>
    %c0_3 = arith.constant 0 : index
    %c0_4 = arith.constant 0 : index
    %3 = vector.load %arg3[%c0_3, %c0_4] : memref<1x128xf32, #tpu.memory_space<vmem>>, vector<1x128xf32>
    %c0_5 = arith.constant 0 : index
    %c0_6 = arith.constant 0 : index
    %4 = vector.load %arg4[%c0_5, %c0_6] : memref<1x128xf32, #tpu.memory_space<vmem>>, vector<1x128xf32>
    %5 = vector.shape_cast %2 : vector<32x128xf32> to vector<1x32x128xf32>
    %6 = arith.mulf %5, %5 : vector<1x32x128xf32>
    %7 = tpu.concatenate %5, %6 in 2 : vector<1x32x128xf32>, vector<1x32x128xf32> -> vector<1x32x256xf32>
    %cst_7 = arith.constant dense<0.000000e+00> : vector<1x256xf32>
    %8 = vector.multi_reduction <add>, %7, %cst_7 [1] : vector<1x32x256xf32> to vector<1x256xf32>
    %cst_8 = arith.constant 3.200000e+01 : f32
    %9 = vector.broadcast %cst_8 : f32 to vector<1x256xf32>
    %10 = arith.divf %8, %9 : vector<1x256xf32>
    %11 = vector.extract_strided_slice %10 {offsets = [0, 0], sizes = [1, 128], strides = [1, 1]} : vector<1x256xf32> to vector<1x128xf32>
    %12 = vector.shape_cast %11 : vector<1x128xf32> to vector<1x1x128xf32>
    %13 = vector.extract_strided_slice %10 {offsets = [0, 128], sizes = [1, 128], strides = [1, 1]} : vector<1x256xf32> to vector<1x128xf32>
    %14 = vector.shape_cast %13 : vector<1x128xf32> to vector<1x1x128xf32>
    %15 = arith.mulf %12, %12 : vector<1x1x128xf32>
    %16 = arith.subf %14, %15 : vector<1x1x128xf32>
    %cst_9 = arith.constant 0.000000e+00 : f32
    %17 = vector.broadcast %cst_9 : f32 to vector<1x1x128xf32>
    %18 = arith.maximumf %16, %17 : vector<1x1x128xf32>
    %cst_10 = arith.constant 9.99999974E-6 : f32
    %19 = vector.broadcast %cst_10 : f32 to vector<1x1x128xf32>
    %20 = arith.addf %18, %19 : vector<1x1x128xf32>
    %21 = math.rsqrt %20 : vector<1x1x128xf32>
    %22 = vector.shape_cast %3 : vector<1x128xf32> to vector<1x1x128xf32>
    %23 = arith.mulf %22, %21 : vector<1x1x128xf32>
    %24 = arith.mulf %12, %23 : vector<1x1x128xf32>
    %25 = vector.shape_cast %4 : vector<1x128xf32> to vector<1x1x128xf32>
    %26 = arith.subf %25, %24 : vector<1x1x128xf32>
    %27 = vector.broadcast %23 : vector<1x1x128xf32> to vector<1x32x128xf32>
    %28 = arith.mulf %5, %27 : vector<1x32x128xf32>
    %29 = vector.broadcast %26 : vector<1x1x128xf32> to vector<1x32x128xf32>
    %30 = arith.addf %28, %29 : vector<1x32x128xf32>
    %cst_11 = arith.constant 0.000000e+00 : f32
    %31 = vector.broadcast %cst_11 : f32 to vector<1x32x128xf32>
    %32 = arith.maximumf %30, %31 : vector<1x32x128xf32>
    %33 = vector.shape_cast %32 : vector<1x32x128xf32> to vector<32x128xf32>
    %34 = arith.truncf %33 : vector<32x128xf32> to vector<32x128xbf16>
    %c0_12 = arith.constant 0 : index
    %c0_13 = arith.constant 0 : index
    %35 = vector.load %arg5[%c0_12, %c0_13] : memref<128x128xbf16, #tpu.memory_space<vmem>>, vector<128x128xbf16>
    %cst_14 = arith.constant dense<0.000000e+00> : vector<32x128xf32>
    %36 = tpu.matmul %34, %35, %cst_14 {dimension_numbers = #tpu.dot_dimension_numbers<[1], [0], [0], [1], [0, 0, 1, 1], [], []>} : vector<32x128xbf16>, vector<128x128xbf16>, vector<32x128xf32> -> vector<32x128xf32>
    %c0_15 = arith.constant 0 : index
    %c0_16 = arith.constant 0 : index
    %37 = vector.load %arg6[%c0_15, %c0_16] : memref<1x128xf32, #tpu.memory_space<vmem>>, vector<1x128xf32>
    %c0_17 = arith.constant 0 : index
    %c0_18 = arith.constant 0 : index
    %38 = vector.load %arg7[%c0_17, %c0_18] : memref<1x128xf32, #tpu.memory_space<vmem>>, vector<1x128xf32>
    %39 = vector.shape_cast %36 : vector<32x128xf32> to vector<1x32x128xf32>
    %40 = arith.mulf %39, %39 : vector<1x32x128xf32>
    %41 = tpu.concatenate %39, %40 in 2 : vector<1x32x128xf32>, vector<1x32x128xf32> -> vector<1x32x256xf32>
    %cst_19 = arith.constant dense<0.000000e+00> : vector<1x256xf32>
    %42 = vector.multi_reduction <add>, %41, %cst_19 [1] : vector<1x32x256xf32> to vector<1x256xf32>
    %cst_20 = arith.constant 3.200000e+01 : f32
    %43 = vector.broadcast %cst_20 : f32 to vector<1x256xf32>
    %44 = arith.divf %42, %43 : vector<1x256xf32>
    %45 = vector.extract_strided_slice %44 {offsets = [0, 0], sizes = [1, 128], strides = [1, 1]} : vector<1x256xf32> to vector<1x128xf32>
    %46 = vector.shape_cast %45 : vector<1x128xf32> to vector<1x1x128xf32>
    %47 = vector.extract_strided_slice %44 {offsets = [0, 128], sizes = [1, 128], strides = [1, 1]} : vector<1x256xf32> to vector<1x128xf32>
    %48 = vector.shape_cast %47 : vector<1x128xf32> to vector<1x1x128xf32>
    %49 = arith.mulf %46, %46 : vector<1x1x128xf32>
    %50 = arith.subf %48, %49 : vector<1x1x128xf32>
    %cst_21 = arith.constant 0.000000e+00 : f32
    %51 = vector.broadcast %cst_21 : f32 to vector<1x1x128xf32>
    %52 = arith.maximumf %50, %51 : vector<1x1x128xf32>
    %cst_22 = arith.constant 9.99999974E-6 : f32
    %53 = vector.broadcast %cst_22 : f32 to vector<1x1x128xf32>
    %54 = arith.addf %52, %53 : vector<1x1x128xf32>
    %55 = math.rsqrt %54 : vector<1x1x128xf32>
    %56 = vector.shape_cast %37 : vector<1x128xf32> to vector<1x1x128xf32>
    %57 = arith.mulf %56, %55 : vector<1x1x128xf32>
    %58 = arith.mulf %46, %57 : vector<1x1x128xf32>
    %59 = vector.shape_cast %38 : vector<1x128xf32> to vector<1x1x128xf32>
    %60 = arith.subf %59, %58 : vector<1x1x128xf32>
    %61 = vector.broadcast %57 : vector<1x1x128xf32> to vector<1x32x128xf32>
    %62 = arith.mulf %39, %61 : vector<1x32x128xf32>
    %63 = vector.broadcast %60 : vector<1x1x128xf32> to vector<1x32x128xf32>
    %64 = arith.addf %62, %63 : vector<1x32x128xf32>
    %cst_23 = arith.constant 0.000000e+00 : f32
    %65 = vector.broadcast %cst_23 : f32 to vector<1x32x128xf32>
    %66 = arith.maximumf %64, %65 : vector<1x32x128xf32>
    %67 = vector.shape_cast %66 : vector<1x32x128xf32> to vector<32x128xf32>
    %68 = arith.truncf %67 : vector<32x128xf32> to vector<32x128xbf16>
    %c0_24 = arith.constant 0 : index
    %c0_25 = arith.constant 0 : index
    %69 = vector.load %arg8[%c0_24, %c0_25] : memref<128x128xbf16, #tpu.memory_space<vmem>>, vector<128x128xbf16>
    %cst_26 = arith.constant dense<0.000000e+00> : vector<32x128xf32>
    %70 = tpu.matmul %68, %69, %cst_26 {dimension_numbers = #tpu.dot_dimension_numbers<[1], [0], [0], [1], [0, 0, 1, 1], [], []>} : vector<32x128xbf16>, vector<128x128xbf16>, vector<32x128xf32> -> vector<32x128xf32>
    %c0_27 = arith.constant 0 : index
    %c0_28 = arith.constant 0 : index
    %71 = vector.load %arg9[%c0_27, %c0_28] : memref<1x128xf32, #tpu.memory_space<vmem>>, vector<1x128xf32>
    %72 = vector.broadcast %71 : vector<1x128xf32> to vector<32x128xf32>
    %73 = arith.addf %70, %72 : vector<32x128xf32>
    %c0_29 = arith.constant 0 : index
    %c0_30 = arith.constant 0 : index
    %74 = vector.load %arg10[%c0_29, %c0_30] : memref<32x128xf32, #tpu.memory_space<vmem>>, vector<32x128xf32>
    tpu.vector_store %arg10[%c0_29, %c0_30], %73 {strides = array<i32>} : memref<32x128xf32, #tpu.memory_space<vmem>>, vector<32x128xf32>,
    return
  }
  func.func @transform_0(%arg0: i32) -> (i32, i32) {
    %c0_i32 = arith.constant 0 : i32
    %c0_i32_0 = arith.constant 0 : i32
    return %arg0, %c0_i32 : i32, i32
  }
  func.func @transform_1(%arg0: i32) -> (i32, i32) {
    %c0_i32 = arith.constant 0 : i32
    %c0_i32_0 = arith.constant 0 : i32
    %c0_i32_1 = arith.constant 0 : i32
    return %c0_i32, %c0_i32_0 : i32, i32
  }
  func.func @transform_2(%arg0: i32) -> (i32, i32) {
    %c0_i32 = arith.constant 0 : i32
    %c0_i32_0 = arith.constant 0 : i32
    %c0_i32_1 = arith.constant 0 : i32
    return %c0_i32, %c0_i32_0 : i32, i32
  }
  func.func @transform_3(%arg0: i32) -> (i32, i32) {
    %c0_i32 = arith.constant 0 : i32
    %c0_i32_0 = arith.constant 0 : i32
    %c0_i32_1 = arith.constant 0 : i32
    return %c0_i32, %c0_i32_0 : i32, i32
  }
  func.func @transform_4(%arg0: i32) -> (i32, i32) {
    %c0_i32 = arith.constant 0 : i32
    %c0_i32_0 = arith.constant 0 : i32
    %c0_i32_1 = arith.constant 0 : i32
    return %c0_i32, %c0_i32_0 : i32, i32
  }
  func.func @transform_5(%arg0: i32) -> (i32, i32) {
    %c0_i32 = arith.constant 0 : i32
    %c0_i32_0 = arith.constant 0 : i32
    %c0_i32_1 = arith.constant 0 : i32
    return %c0_i32, %c0_i32_0 : i32, i32
  }
  func.func @transform_6(%arg0: i32) -> (i32, i32) {
    %c0_i32 = arith.constant 0 : i32
    %c0_i32_0 = arith.constant 0 : i32
    %c0_i32_1 = arith.constant 0 : i32
    return %c0_i32, %c0_i32_0 : i32, i32
  }
  func.func @transform_7(%arg0: i32) -> (i32, i32) {
    %c0_i32 = arith.constant 0 : i32
    %c0_i32_0 = arith.constant 0 : i32
    %c0_i32_1 = arith.constant 0 : i32
    return %c0_i32, %c0_i32_0 : i32, i32
  }
  func.func @transform_8(%arg0: i32) -> (i32, i32) {
    %c0_i32 = arith.constant 0 : i32
    %c0_i32_0 = arith.constant 0 : i32
    %c0_i32_1 = arith.constant 0 : i32
    return %c0_i32, %c0_i32_0 : i32, i32
  }
  func.func @transform_9(%arg0: i32) -> (i32, i32) {
    %c0_i32 = arith.constant 0 : i32
    %c0_i32_0 = arith.constant 0 : i32
    return %arg0, %c0_i32 : i32, i32
  }
}

</mosaic_0001>

<llo_original>
// kernel: tpu_custom_call.1
$region0: #{tpu_custom_call.1}
  #allocation0 [shape = 'u32[]', space=smem, size = 0x4, offset = 0x4, fixed_abs, tag = 'smem constant byte address 0x4 - core index']
  #allocation1 [shape = 'u32[72,128]{1,0:T(1,128)}', space=vmem, size = 0x9000, scoped, tag = 'internal scratch']
  %s0 = inlined_call_operand.hbm [shape: bf16[64,896], index: 0, kind: input, shape index: {}]
  %s1 = inlined_call_operand.hbm [shape: bf16[896,128], index: 1, kind: input, shape index: {}]
  %s2 = inlined_call_operand.vmem [shape: f32[1,128], index: 2, kind: input, shape index: {}]
  %s3 = inlined_call_operand.vmem [shape: f32[1,128], index: 3, kind: input, shape index: {}]
  %s4 = inlined_call_operand.hbm [shape: bf16[128,128], index: 4, kind: input, shape index: {}]
  %s5 = inlined_call_operand.vmem [shape: f32[1,128], index: 5, kind: input, shape index: {}]
  %s6 = inlined_call_operand.vmem [shape: f32[1,128], index: 6, kind: input, shape index: {}]
  %s7 = inlined_call_operand.hbm [shape: bf16[128,128], index: 7, kind: input, shape index: {}]
  %s8 = inlined_call_operand.vmem [shape: f32[1,128], index: 8, kind: input, shape index: {}]
  %s9 = inlined_call_operand.hbm [shape: f32[64,128], index: 9, kind: output, shape index: {}]
  %s10 = sld [smem:[#allocation0]]
  $region85: #{tpu_custom_call.1} parent=0
    _
  %s12 = ssub.s32 1, %s10
  %s13 = scalar_select 0, %s12, %s10
  $region1: #{tpu_custom_call.1} parent=0
    #allocation2 [shape = 'u8[114688]{0}', space=vmem, size = 0x1c000, scoped, tag = 'input window, operand 0']
    #allocation3 [shape = 's32[2]{0}', space=sflag, size = 0x8, scoped, tag = 'scoped memory for tpu_custom_call.1']
    #allocation4 [shape = 's32[2]{0}', space=sflag, size = 0x8, scoped, tag = 'scoped memory for tpu_custom_call.1']
    #allocation5 [shape = 'u8[229376]{0}', space=vmem, size = 0x38000, scoped, tag = 'input window, operand 1, single buffered']
    #allocation6 [shape = 's32[1]{0}', space=sflag, size = 0x4, scoped, tag = 'scoped memory for tpu_custom_call.1']
    #allocation7 [shape = 'u8[32768]{0}', space=vmem, size = 0x8000, scoped, tag = 'input window, operand 4, single buffered']
    #allocation8 [shape = 'u8[32768]{0}', space=vmem, size = 0x8000, scoped, tag = 'input window, operand 7, single buffered']
    #allocation9 [shape = 's32[1]{0}', space=sflag, size = 0x4, scoped, tag = 'scoped memory for tpu_custom_call.1']
    #allocation10 [shape = 'u8[32768]{0}', space=vmem, size = 0x8000, scoped, tag = 'output window, operand 0']
    %14 = vsyncpa [#allocation3], 0
    %s15 = scalar_lea.sflag [#allocation3], 1
    %16 = vsyncpa %s15, 0
    %17 = vsyncpa [#allocation6], 0
    %18 = vsyncpa [#allocation9], 0
    %19 = vsyncpa [#allocation4], 0
    %s20 = scalar_lea.sflag [#allocation4], 1
    %21 = vsyncpa %s20, 0
    loop: start=0, step=1, limit=4
    $region2: #{tpu_custom_call.1} parent=1 // loop_pre_header
      _
    $region3: #{tpu_custom_call.1} parent=1 // loop_header
      %s23 = sphi 0, %s27
      %p24 = scmp.ge.s32.totalorder %s23, 4
      %s33 = sphi 0, %s35
      %s36 = sphi 0, %s33
      %s37 = sphi 0, %s36
      %s53 = sphi 0, %s37
      %s57 = sphi 0, %s57
      %s59 = sphi 0, %s57
      %s60 = sphi 0, %s59
      %s74 = sphi 0, %s60
      %s78 = sphi 0, %s78
      %s80 = sphi 0, %s78
      %s81 = sphi 0, %s80
      %s95 = sphi 0, %s81
      %s99 = sphi 0, %s99
      %s101 = sphi 0, %s99
      %s102 = sphi 0, %s101
      %s116 = sphi 0, %s102
      %s120 = sphi 0, %s120
      %s122 = sphi 0, %s120
      %s123 = sphi 0, %s122
      %s137 = sphi 0, %s123
      %s141 = sphi 0, %s141
      %s143 = sphi 0, %s141
      %s144 = sphi 0, %s143
      %s158 = sphi 0, %s144
      %s162 = sphi 0, %s162
      %s164 = sphi 0, %s162
      %s165 = sphi 0, %s164
      %s179 = sphi 0, %s165
      %s183 = sphi 0, %s183
      %s185 = sphi 0, %s183
      %s186 = sphi 0, %s185
      %s200 = sphi 0, %s186
      %s204 = sphi 0, %s204
      %s206 = sphi 0, %s204
      %s207 = sphi 0, %s206
      %s221 = sphi 0, %s207
      %s227 = sphi 0, %s229
      %s230 = sphi 0, %s227
      %s231 = sphi 0, %s230
      %s247 = sphi 0, %s231
    $region4: #{tpu_custom_call.1} parent=1 // loop_header_branch
      %26 = sbr.rel (%p24) target = $region8
    $region5: #{tpu_custom_call.1} parent=1 // loop_body
      %s28 = ssub.s32 %s23, 1
      %s29 = ssub.s32 %s23, 2
      %s30 = sadd.s32 %s23, 1
      %s31 = ssub.s32 %s23, %s30
      %p32 = scmp.eq.s32.totalorder %s31, 0
      %s34 = sadd.s32 %s33, 1
      %s35 = scalar_select %p32, %s33, %s34
      %p38 = pneg %p32
      %p39 = scmp.eq.s32.totalorder %s23, 1
      %p40 = por %p38, %p39
      %p41 = scmp.ne.s32.totalorder %s33, %s36
      %p42 = scmp.eq.s32.totalorder %s23, 0
      %p43 = por %p41, %p42
      %p44 = scmp.ne.s32.totalorder %s33, %s36
      %p45 = scmp.eq.s32.totalorder %s28, 1
      %p46 = por %p44, %p45
      %p47 = scmp.ne.s32.totalorder %s36, %s37
      %p48 = scmp.eq.s32.totalorder %s28, 0
      %p49 = por %p47, %p48
      %p50 = scmp.ne.s32.totalorder %s36, %s37
      %p51 = scmp.eq.s32.totalorder %s29, 1
      %p52 = por %p50, %p51
      %p54 = scmp.ne.s32.totalorder %s37, %s53
      %p55 = scmp.eq.s32.totalorder %s29, 0
      %p56 = por %p54, %p55
      %s58 = sadd.s32 %s57, 1
      %p61 = scmp.eq.s32.totalorder %s23, 1
      %p62 = scmp.ne.s32.totalorder %s57, %s59
      %p63 = scmp.eq.s32.totalorder %s23, 0
      %p64 = por %p62, %p63
      %p65 = scmp.ne.s32.totalorder %s57, %s59
      %p66 = scmp.eq.s32.totalorder %s28, 1
      %p67 = por %p65, %p66
      %p68 = scmp.ne.s32.totalorder %s59, %s60
      %p69 = scmp.eq.s32.totalorder %s28, 0
      %p70 = por %p68, %p69
      %p71 = scmp.ne.s32.totalorder %s59, %s60
      %p72 = scmp.eq.s32.totalorder %s29, 1
      %p73 = por %p71, %p72
      %p75 = scmp.ne.s32.totalorder %s60, %s74
      %p76 = scmp.eq.s32.totalorder %s29, 0
      %p77 = por %p75, %p76
      %s79 = sadd.s32 %s78, 1
      %p82 = scmp.eq.s32.totalorder %s23, 1
      %p83 = scmp.ne.s32.totalorder %s78, %s80
      %p84 = scmp.eq.s32.totalorder %s23, 0
      %p85 = por %p83, %p84
      %p86 = scmp.ne.s32.totalorder %s78, %s80
      %p87 = scmp.eq.s32.totalorder %s28, 1
      %p88 = por %p86, %p87
      %p89 = scmp.ne.s32.totalorder %s80, %s81
      %p90 = scmp.eq.s32.totalorder %s28, 0
      %p91 = por %p89, %p90
      %p92 = scmp.ne.s32.totalorder %s80, %s81
      %p93 = scmp.eq.s32.totalorder %s29, 1
      %p94 = por %p92, %p93
      %p96 = scmp.ne.s32.totalorder %s81, %s95
      %p97 = scmp.eq.s32.totalorder %s29, 0
      %p98 = por %p96, %p97
      %s100 = sadd.s32 %s99, 1
      %p103 = scmp.eq.s32.totalorder %s23, 1
      %p104 = scmp.ne.s32.totalorder %s99, %s101
      %p105 = scmp.eq.s32.totalorder %s23, 0
      %p106 = por %p104, %p105
      %p107 = scmp.ne.s32.totalorder %s99, %s101
      %p108 = scmp.eq.s32.totalorder %s28, 1
      %p109 = por %p107, %p108
      %p110 = scmp.ne.s32.totalorder %s101, %s102
      %p111 = scmp.eq.s32.totalorder %s28, 0
      %p112 = por %p110, %p111
      %p113 = scmp.ne.s32.totalorder %s101, %s102
      %p114 = scmp.eq.s32.totalorder %s29, 1
      %p115 = por %p113, %p114
      %p117 = scmp.ne.s32.totalorder %s102, %s116
      %p118 = scmp.eq.s32.totalorder %s29, 0
      %p119 = por %p117, %p118
      %s121 = sadd.s32 %s120, 1
      %p124 = scmp.eq.s32.totalorder %s23, 1
      %p125 = scmp.ne.s32.totalorder %s120, %s122
      %p126 = scmp.eq.s32.totalorder %s23, 0
      %p127 = por %p125, %p126
      %p128 = scmp.ne.s32.totalorder %s120, %s122
      %p129 = scmp.eq.s32.totalorder %s28, 1
      %p130 = por %p128, %p129
      %p131 = scmp.ne.s32.totalorder %s122, %s123
      %p132 = scmp.eq.s32.totalorder %s28, 0
      %p133 = por %p131, %p132
      %p134 = scmp.ne.s32.totalorder %s122, %s123
      %p135 = scmp.eq.s32.totalorder %s29, 1
      %p136 = por %p134, %p135
      %p138 = scmp.ne.s32.totalorder %s123, %s137
      %p139 = scmp.eq.s32.totalorder %s29, 0
      %p140 = por %p138, %p139
      %s142 = sadd.s32 %s141, 1
      %p145 = scmp.eq.s32.totalorder %s23, 1
      %p146 = scmp.ne.s32.totalorder %s141, %s143
      %p147 = scmp.eq.s32.totalorder %s23, 0
      %p148 = por %p146, %p147
      %p149 = scmp.ne.s32.totalorder %s141, %s143
      %p150 = scmp.eq.s32.totalorder %s28, 1
      %p151 = por %p149, %p150
      %p152 = scmp.ne.s32.totalorder %s143, %s144
      %p153 = scmp.eq.s32.totalorder %s28, 0
      %p154 = por %p152, %p153
      %p155 = scmp.ne.s32.totalorder %s143, %s144
      %p156 = scmp.eq.s32.totalorder %s29, 1
      %p157 = por %p155, %p156
      %p159 = scmp.ne.s32.totalorder %s144, %s158
      %p160 = scmp.eq.s32.totalorder %s29, 0
      %p161 = por %p159, %p160
      %s163 = sadd.s32 %s162, 1
      %p166 = scmp.eq.s32.totalorder %s23, 1
      %p167 = scmp.ne.s32.totalorder %s162, %s164
      %p168 = scmp.eq.s32.totalorder %s23, 0
      %p169 = por %p167, %p168
      %p170 = scmp.ne.s32.totalorder %s162, %s164
      %p171 = scmp.eq.s32.totalorder %s28, 1
      %p172 = por %p170, %p171
      %p173 = scmp.ne.s32.totalorder %s164, %s165
      %p174 = scmp.eq.s32.totalorder %s28, 0
      %p175 = por %p173, %p174
      %p176 = scmp.ne.s32.totalorder %s164, %s165
      %p177 = scmp.eq.s32.totalorder %s29, 1
      %p178 = por %p176, %p177
      %p180 = scmp.ne.s32.totalorder %s165, %s179
      %p181 = scmp.eq.s32.totalorder %s29, 0
      %p182 = por %p180, %p181
      %s184 = sadd.s32 %s183, 1
      %p187 = scmp.eq.s32.totalorder %s23, 1
      %p188 = scmp.ne.s32.totalorder %s183, %s185
      %p189 = scmp.eq.s32.totalorder %s23, 0
      %p190 = por %p188, %p189
      %p191 = scmp.ne.s32.totalorder %s183, %s185
      %p192 = scmp.eq.s32.totalorder %s28, 1
      %p193 = por %p191, %p192
      %p194 = scmp.ne.s32.totalorder %s185, %s186
      %p195 = scmp.eq.s32.totalorder %s28, 0
      %p196 = por %p194, %p195
      %p197 = scmp.ne.s32.totalorder %s185, %s186
      %p198 = scmp.eq.s32.totalorder %s29, 1
      %p199 = por %p197, %p198
      %p201 = scmp.ne.s32.totalorder %s186, %s200
      %p202 = scmp.eq.s32.totalorder %s29, 0
      %p203 = por %p201, %p202
      %s205 = sadd.s32 %s204, 1
      %p208 = scmp.eq.s32.totalorder %s23, 1
      %p209 = scmp.ne.s32.totalorder %s204, %s206
      %p210 = scmp.eq.s32.totalorder %s23, 0
      %p211 = por %p209, %p210
      %p212 = scmp.ne.s32.totalorder %s204, %s206
      %p213 = scmp.eq.s32.totalorder %s28, 1
      %p214 = por %p212, %p213
      %p215 = scmp.ne.s32.totalorder %s206, %s207
      %p216 = scmp.eq.s32.totalorder %s28, 0
      %p217 = por %p215, %p216
      %p218 = scmp.ne.s32.totalorder %s206, %s207
      %p219 = scmp.eq.s32.totalorder %s29, 1
      %p220 = por %p218, %p219
      %p222 = scmp.ne.s32.totalorder %s207, %s221
      %p223 = scmp.eq.s32.totalorder %s29, 0
      %p224 = por %p222, %p223
      %s225 = ssub.s32 %s23, %s30
      %p226 = scmp.eq.s32.totalorder %s225, 0
      %s228 = sadd.s32 %s227, 1
      %s229 = scalar_select %p226, %s227, %s228
      %p232 = pneg %p226
      %p233 = scmp.eq.s32.totalorder %s23, 1
      %p234 = por %p232, %p233
      %p235 = scmp.ne.s32.totalorder %s227, %s230
      %p236 = scmp.eq.s32.totalorder %s23, 0
      %p237 = por %p235, %p236
      %p238 = scmp.ne.s32.totalorder %s227, %s230
      %p239 = scmp.eq.s32.totalorder %s28, 1
      %p240 = por %p238, %p239
      %p241 = scmp.ne.s32.totalorder %s230, %s231
      %p242 = scmp.eq.s32.totalorder %s28, 0
      %p243 = por %p241, %p242
      %p244 = scmp.ne.s32.totalorder %s230, %s231
      %p245 = scmp.eq.s32.totalorder %s29, 1
      %p246 = por %p244, %p245
      %p248 = scmp.ne.s32.totalorder %s231, %s247
      %p249 = scmp.eq.s32.totalorder %s29, 0
      %p250 = por %p248, %p249
      %p251 = scmp.le.s32.totalorder 1, %s23
      %p252 = scmp.lt.s32.totalorder %s23, 3
      %p253 = pnand %p251, %p252
      %p254 = pneg %p253
      // Predicated region
      $region9: #{tpu_custom_call.1} parent=5 // pred_check
        _
      $region10: #{tpu_custom_call.1} parent=5 // pred_check_branch
        %256 = sbr.rel (%p253) target = $region12
      $region11: #{tpu_custom_call.1} parent=5 // pred_region
        %s257 = ssub.s32 %s23, 1
        // Predicated region
        $region13: #{tpu_custom_call.1} parent=11 // pred_check
          %p258 = pneg %p70
        $region14: #{tpu_custom_call.1} parent=11 // pred_check_branch
          %260 = sbr.rel (%p258) target = $region16
        $region15: #{tpu_custom_call.1} parent=11 // pred_region
          %262 = vsyncadd [#allocation6], 0
          %s263 = sshll.u32 %s1, 4
          %s264 = int_to_ptr.hbm [resolvable:$true] %s263
          %s265 = sshll.u32 [#allocation5], 4
          %s266 = int_to_ptr.vmem [resolvable:$true] %s265
          %271 = dma.hbm_to_vmem [thread:$0]  %s264, 7168, %s266, [#allocation6], 64, 64, 4
        $region16: #{tpu_custom_call.1} parent=11 // pred_fallthru
          _
        // Predicated region
        $region17: #{tpu_custom_call.1} parent=11 // pred_check
          %p272 = pneg %p91
        $region18: #{tpu_custom_call.1} parent=11 // pred_check_branch
          %274 = sbr.rel (%p272) target = $region20
        $region19: #{tpu_custom_call.1} parent=11 // pred_region
          _
        $region20: #{tpu_custom_call.1} parent=11 // pred_fallthru
          _
        // Predicated region
        $region21: #{tpu_custom_call.1} parent=11 // pred_check
          %p275 = pneg %p112
        $region22: #{tpu_custom_call.1} parent=11 // pred_check_branch
          %277 = sbr.rel (%p275) target = $region24
        $region23: #{tpu_custom_call.1} parent=11 // pred_region
          _
        $region24: #{tpu_custom_call.1} parent=11 // pred_fallthru
          _
        // Predicated region
        $region25: #{tpu_custom_call.1} parent=11 // pred_check
          %p278 = pneg %p133
        $region26: #{tpu_custom_call.1} parent=11 // pred_check_branch
          %280 = sbr.rel (%p278) target = $region28
        $region27: #{tpu_custom_call.1} parent=11 // pred_region
          %282 = vsyncadd [#allocation6], 0
          %s283 = sshll.u32 %s4, 4
          %s284 = int_to_ptr.hbm [resolvable:$true] %s283
          %s285 = sshll.u32 [#allocation7], 4
          %s286 = int_to_ptr.vmem [resolvable:$true] %s285
          %291 = dma.hbm_to_vmem [thread:$0]  %s284, 1024, %s286, [#allocation6], 64, 64, 4
        $region28: #{tpu_custom_call.1} parent=11 // pred_fallthru
          _
        // Predicated region
        $region29: #{tpu_custom_call.1} parent=11 // pred_check
          %p292 = pneg %p154
        $region30: #{tpu_custom_call.1} parent=11 // pred_check_branch
          %294 = sbr.rel (%p292) target = $region32
        $region31: #{tpu_custom_call.1} parent=11 // pred_region
          _
        $region32: #{tpu_custom_call.1} parent=11 // pred_fallthru
          _
        // Predicated region
        $region33: #{tpu_custom_call.1} parent=11 // pred_check
          %p295 = pneg %p175
        $region34: #{tpu_custom_call.1} parent=11 // pred_check_branch
          %297 = sbr.rel (%p295) target = $region36
        $region35: #{tpu_custom_call.1} parent=11 // pred_region
          _
        $region36: #{tpu_custom_call.1} parent=11 // pred_fallthru
          _
        // Predicated region
        $region37: #{tpu_custom_call.1} parent=11 // pred_check
          %p298 = pneg %p196
        $region38: #{tpu_custom_call.1} parent=11 // pred_check_branch
          %300 = sbr.rel (%p298) target = $region40
        $region39: #{tpu_custom_call.1} parent=11 // pred_region
          %302 = vsyncadd [#allocation9], 0
          %s303 = sshll.u32 %s7, 4
          %s304 = int_to_ptr.hbm [resolvable:$true] %s303
          %s305 = sshll.u32 [#allocation8], 4
          %s306 = int_to_ptr.vmem [resolvable:$true] %s305
          %311 = dma.hbm_to_vmem [thread:$0]  %s304, 1024, %s306, [#allocation9], 64, 64, 4
        $region40: #{tpu_custom_call.1} parent=11 // pred_fallthru
          _
        // Predicated region
        $region41: #{tpu_custom_call.1} parent=11 // pred_check
          %p312 = pneg %p217
        $region42: #{tpu_custom_call.1} parent=11 // pred_check_branch
          %314 = sbr.rel (%p312) target = $region44
        $region43: #{tpu_custom_call.1} parent=11 // pred_region
          _
        $region44: #{tpu_custom_call.1} parent=11 // pred_fallthru
          _
      $region12: #{tpu_custom_call.1} parent=5 // pred_fallthru
        _
      %p315 = scmp.lt.s32.totalorder %s23, 2
      // Predicated region
      $region45: #{tpu_custom_call.1} parent=5 // pred_check
        %p316 = pneg %p315
      $region46: #{tpu_custom_call.1} parent=5 // pred_check_branch
        %318 = sbr.rel (%p316) target = $region48
      $region47: #{tpu_custom_call.1} parent=5 // pred_region
        // Predicated region
        $region49: #{tpu_custom_call.1} parent=47 // pred_check
          %p319 = pneg %p43
        $region50: #{tpu_custom_call.1} parent=47 // pred_check_branch
          %321 = sbr.rel (%p319) target = $region52
        $region51: #{tpu_custom_call.1} parent=47 // pred_region
          %s322 = sand.u32 %s33, 1
          %s323 = scalar_lea.sflag [#allocation3], %s322
          %s324 = sand.u32 %s33, 1
          %s325 = smul.addr %s324, 112
          %s326 = scalar_lea.vmem [#allocation2], %s325
          %s327 = smul.u32 4, %s23
          %329 = vsyncadd %s323, 0
          %s330 = smul.addr %s327, 7
          %s331 = smul.addr %s330, 4
          %s332 = scalar_lea.hbm %s0, %s331
          %s333 = sshll.u32 %s332, 4
          %s334 = int_to_ptr.hbm [resolvable:$true] %s333
          %s335 = sshll.u32 %s326, 4
          %s336 = int_to_ptr.vmem [resolvable:$true] %s335
          %341 = dma.hbm_to_vmem [thread:$0]  %s334, 1792, %s336, %s323, 448, 448, 28
        $region52: #{tpu_custom_call.1} parent=47 // pred_fallthru
          _
      $region48: #{tpu_custom_call.1} parent=5 // pred_fallthru
        _
      %p342 = scmp.le.s32.totalorder 1, %s23
      %p343 = scmp.lt.s32.totalorder %s23, 3
      %p344 = pnand %p342, %p343
      %p345 = pneg %p344
      // Predicated region
      $region53: #{tpu_custom_call.1} parent=5 // pred_check
        _
      $region54: #{tpu_custom_call.1} parent=5 // pred_check_branch
        %347 = sbr.rel (%p344) target = $region56
      $region55: #{tpu_custom_call.1} parent=5 // pred_region
        %s348 = ssub.s32 %s23, 1
        %s349 = sand.u32 %s36, 1
        %s350 = scalar_lea.sflag [#allocation3], %s349
        %s351 = sand.u32 %s36, 1
        %s352 = smul.addr %s351, 112
        %s353 = scalar_lea.vmem [#allocation2], %s352
        // Predicated region
        $region57: #{tpu_custom_call.1} parent=55 // pred_check
          %p354 = pneg %p49
        $region58: #{tpu_custom_call.1} parent=55 // pred_check_branch
          %356 = sbr.rel (%p354) target = $region60
        $region59: #{tpu_custom_call.1} parent=55 // pred_region
          %358 = dma.done %s350, 1792
        $region60: #{tpu_custom_call.1} parent=55 // pred_fallthru
          _
        // Predicated region
        $region61: #{tpu_custom_call.1} parent=55 // pred_check
          %p359 = pneg %p70
        $region62: #{tpu_custom_call.1} parent=55 // pred_check_branch
          %361 = sbr.rel (%p359) target = $region64
        $region63: #{tpu_custom_call.1} parent=55 // pred_region
          %363 = dma.done [#allocation6], 7168
        $region64: #{tpu_custom_call.1} parent=55 // pred_fallthru
          _
        // Predicated region
        $region65: #{tpu_custom_call.1} parent=55 // pred_check
          %p364 = pneg %p133
        $region66: #{tpu_custom_call.1} parent=55 // pred_check_branch
          %366 = sbr.rel (%p364) target = $region68
        $region67: #{tpu_custom_call.1} parent=55 // pred_region
          %368 = dma.done [#allocation6], 1024
        $region68: #{tpu_custom_call.1} parent=55 // pred_fallthru
          _
        // Predicated region
        $region69: #{tpu_custom_call.1} parent=55 // pred_check
          %p369 = pneg %p196
        $region70: #{tpu_custom_call.1} parent=55 // pred_check_branch
          %371 = sbr.rel (%p369) target = $region72
        $region71: #{tpu_custom_call.1} parent=55 // pred_region
          %373 = dma.done [#allocation9], 1024
        $region72: #{tpu_custom_call.1} parent=55 // pred_fallthru
          _
        %s374 = sand.u32 %s36, 1
        %s375 = scalar_lea.sflag [#allocation3], %s374
        %s376 = sand.u32 %s36, 1
        %s377 = smul.addr %s376, 112
        %s378 = scalar_lea.vmem [#allocation2], %s377
        %p379 = pneg %p49
        %p380 = pneg %p46
        %p381 = pneg %p70
        %p382 = pneg %p67
        %p383 = pneg %p91
        %p384 = pneg %p88
        %p385 = pneg %p112
        %p386 = pneg %p109
        %p387 = pneg %p133
        %p388 = pneg %p130
        %p389 = pneg %p154
        %p390 = pneg %p151
        %p391 = pneg %p175
        %p392 = pneg %p172
        %p393 = pneg %p196
        %p394 = pneg %p193
        %p395 = pneg %p217
        %p396 = pneg %p214
        %p397 = pneg %p243
        %p398 = pneg %p240
        %s399 = sand.u32 %s230, 1
        %s400 = scalar_lea.sflag [#allocation4], %s399
        %s401 = sand.u32 %s230, 1
        %s402 = smul.addr %s401, 32
        %s403 = scalar_lea.vmem [#allocation10], %s402
        %s404 = smul.u32 4, %s28
        %s405 = smul.u32 4, %s28
        %v406 = vld [vmem:[%s353] sm:$0xff]
        %v407 = vld [vmem:[%s353 + $0x8] sm:$0xff]
        %v408 = vld [vmem:[%s353 + $0x10] sm:$0xff]
        %v409 = vld [vmem:[%s353 + $0x18] sm:$0xf]
        %v410 = vld [vmem:[%s353 + $0x1c] sm:$0xff]
        %v411 = vld [vmem:[%s353 + $0x24] sm:$0xff]
        %v412 = vld [vmem:[%s353 + $0x2c] sm:$0xff]
        %v413 = vld [vmem:[%s353 + $0x34] sm:$0xf]
        %v414 = vld [vmem:[%s353 + $0x38] sm:$0xff]
        %v415 = vld [vmem:[%s353 + $0x40] sm:$0xff]
        %v416 = vld [vmem:[%s353 + $0x48] sm:$0xff]
        %v417 = vld [vmem:[%s353 + $0x50] sm:$0xf]
        %v418 = vld [vmem:[%s353 + $0x54] sm:$0xff]
        %v419 = vld [vmem:[%s353 + $0x5c] sm:$0xff]
        %v420 = vld [vmem:[%s353 + $0x64] sm:$0xff]
        %v421 = vld [vmem:[%s353 + $0x6c] sm:$0xf]
        %v422 = vld [vmem:[#allocation5] sm:$0xf]
        %v423 = vld [vmem:[#allocation5 + $0x4] sm:$0xf]
        %v424 = vld [vmem:[#allocation5 + $0x8] sm:$0xf]
        %v425 = vld [vmem:[#allocation5 + $0xc] sm:$0xf]
        %v426 = vld [vmem:[#allocation5 + $0x10] sm:$0xf]
        %v427 = vld [vmem:[#allocation5 + $0x14] sm:$0xf]
        %v428 = vld [vmem:[#allocation5 + $0x18] sm:$0xf]
        %v429 = vld [vmem:[#allocation5 + $0x1c] sm:$0xf]
        %v430 = vld [vmem:[#allocation5 + $0x20] sm:$0xf]
        %v431 = vld [vmem:[#allocation5 + $0x24] sm:$0xf]
        %v432 = vld [vmem:[#allocation5 + $0x28] sm:$0xf]
        %v433 = vld [vmem:[#allocation5 + $0x2c] sm:$0xf]
        %v434 = vld [vmem:[#allocation5 + $0x30] sm:$0xf]
        %v435 = vld [vmem:[#allocation5 + $0x34] sm:$0xf]
        %v436 = vld [vmem:[#allocation5 + $0x38] sm:$0xf]
        %v437 = vld [vmem:[#allocation5 + $0x3c] sm:$0xf]
        %v438 = vld [vmem:[#allocation5 + $0x40] sm:$0xf]
        %v439 = vld [vmem:[#allocation5 + $0x44] sm:$0xf]
        %v440 = vld [vmem:[#allocation5 + $0x48] sm:$0xf]
        %v441 = vld [vmem:[#allocation5 + $0x4c] sm:$0xf]
        %v442 = vld [vmem:[#allocation5 + $0x50] sm:$0xf]
        %v443 = vld [vmem:[#allocation5 + $0x54] sm:$0xf]
        %v444 = vld [vmem:[#allocation5 + $0x58] sm:$0xf]
        %v445 = vld [vmem:[#allocation5 + $0x5c] sm:$0xf]
        %v446 = vld [vmem:[#allocation5 + $0x60] sm:$0xf]
        %v447 = vld [vmem:[#allocation5 + $0x64] sm:$0xf]
        %v448 = vld [vmem:[#allocation5 + $0x68] sm:$0xf]
        %v449 = vld [vmem:[#allocation5 + $0x6c] sm:$0xf]
        %v450 = vld [vmem:[#allocation5 + $0x70] sm:$0xf]
        %v451 = vld [vmem:[#allocation5 + $0x74] sm:$0xf]
        %v452 = vld [vmem:[#allocation5 + $0x78] sm:$0xf]
        %v453 = vld [vmem:[#allocation5 + $0x7c] sm:$0xf]
        %v454 = vld [vmem:[#allocation5 + $0x80] sm:$0xf]
        %v455 = vld [vmem:[#allocation5 + $0x84] sm:$0xf]
        %v456 = vld [vmem:[#allocation5 + $0x88] sm:$0xf]
        %v457 = vld [vmem:[#allocation5 + $0x8c] sm:$0xf]
        %v458 = vld [vmem:[#allocation5 + $0x90] sm:$0xf]
        %v459 = vld [vmem:[#allocation5 + $0x94] sm:$0xf]
        %v460 = vld [vmem:[#allocation5 + $0x98] sm:$0xf]
        %v461 = vld [vmem:[#allocation5 + $0x9c] sm:$0xf]
        %v462 = vld [vmem:[#allocation5 + $0xa0] sm:$0xf]
        %v463 = vld [vmem:[#allocation5 + $0xa4] sm:$0xf]
        %v464 = vld [vmem:[#allocation5 + $0xa8] sm:$0xf]
        %v465 = vld [vmem:[#allocation5 + $0xac] sm:$0xf]
        %v466 = vld [vmem:[#allocation5 + $0xb0] sm:$0xf]
        %v467 = vld [vmem:[#allocation5 + $0xb4] sm:$0xf]
        %v468 = vld [vmem:[#allocation5 + $0xb8] sm:$0xf]
        %v469 = vld [vmem:[#allocation5 + $0xbc] sm:$0xf]
        %v470 = vld [vmem:[#allocation5 + $0xc0] sm:$0xf]
        %v471 = vld [vmem:[#allocation5 + $0xc4] sm:$0xf]
        %v472 = vld [vmem:[#allocation5 + $0xc8] sm:$0xf]
        %v473 = vld [vmem:[#allocation5 + $0xcc] sm:$0xf]
        %v474 = vld [vmem:[#allocation5 + $0xd0] sm:$0xf]
        %v475 = vld [vmem:[#allocation5 + $0xd4] sm:$0xf]
        %v476 = vld [vmem:[#allocation5 + $0xd8] sm:$0xf]
        %v477 = vld [vmem:[#allocation5 + $0xdc] sm:$0xf]
        %v478 = vld [vmem:[#allocation5 + $0xe0] sm:$0xf]
        %v479 = vld [vmem:[#allocation5 + $0xe4] sm:$0xf]
        %v480 = vld [vmem:[#allocation5 + $0xe8] sm:$0xf]
        %v481 = vld [vmem:[#allocation5 + $0xec] sm:$0xf]
        %v482 = vld [vmem:[#allocation5 + $0xf0] sm:$0xf]
        %v483 = vld [vmem:[#allocation5 + $0xf4] sm:$0xf]
        %v484 = vld [vmem:[#allocation5 + $0xf8] sm:$0xf]
        %v485 = vld [vmem:[#allocation5 + $0xfc] sm:$0xf]
        %v486 = vld [vmem:[#allocation5 + $0x100] sm:$0xf]
        %v487 = vld [vmem:[#allocation5 + $0x104] sm:$0xf]
        %v488 = vld [vmem:[#allocation5 + $0x108] sm:$0xf]
        %v489 = vld [vmem:[#allocation5 + $0x10c] sm:$0xf]
        %v490 = vld [vmem:[#allocation5 + $0x110] sm:$0xf]
        %v491 = vld [vmem:[#allocation5 + $0x114] sm:$0xf]
        %v492 = vld [vmem:[#allocation5 + $0x118] sm:$0xf]
        %v493 = vld [vmem:[#allocation5 + $0x11c] sm:$0xf]
        %v494 = vld [vmem:[#allocation5 + $0x120] sm:$0xf]
        %v495 = vld [vmem:[#allocation5 + $0x124] sm:$0xf]
        %v496 = vld [vmem:[#allocation5 + $0x128] sm:$0xf]
        %v497 = vld [vmem:[#allocation5 + $0x12c] sm:$0xf]
        %v498 = vld [vmem:[#allocation5 + $0x130] sm:$0xf]
        %v499 = vld [vmem:[#allocation5 + $0x134] sm:$0xf]
        %v500 = vld [vmem:[#allocation5 + $0x138] sm:$0xf]
        %v501 = vld [vmem:[#allocation5 + $0x13c] sm:$0xf]
        %v502 = vld [vmem:[#allocation5 + $0x140] sm:$0xf]
        %v503 = vld [vmem:[#allocation5 + $0x144] sm:$0xf]
        %v504 = vld [vmem:[#allocation5 + $0x148] sm:$0xf]
        %v505 = vld [vmem:[#allocation5 + $0x14c] sm:$0xf]
        %v506 = vld [vmem:[#allocation5 + $0x150] sm:$0xf]
        %v507 = vld [vmem:[#allocation5 + $0x154] sm:$0xf]
        %v508 = vld [vmem:[#allocation5 + $0x158] sm:$0xf]
        %v509 = vld [vmem:[#allocation5 + $0x15c] sm:$0xf]
        %v510 = vld [vmem:[#allocation5 + $0x160] sm:$0xf]
        %v511 = vld [vmem:[#allocation5 + $0x164] sm:$0xf]
        %v512 = vld [vmem:[#allocation5 + $0x168] sm:$0xf]
        %v513 = vld [vmem:[#allocation5 + $0x16c] sm:$0xf]
        %v514 = vld [vmem:[#allocation5 + $0x170] sm:$0xf]
        %v515 = vld [vmem:[#allocation5 + $0x174] sm:$0xf]
        %v516 = vld [vmem:[#allocation5 + $0x178] sm:$0xf]
        %v517 = vld [vmem:[#allocation5 + $0x17c] sm:$0xf]
        %v518 = vld [vmem:[#allocation5 + $0x180] sm:$0xf]
        %v519 = vld [vmem:[#allocation5 + $0x184] sm:$0xf]
        %v520 = vld [vmem:[#allocation5 + $0x188] sm:$0xf]
        %v521 = vld [vmem:[#allocation5 + $0x18c] sm:$0xf]
        %v522 = vld [vmem:[#allocation5 + $0x190] sm:$0xf]
        %v523 = vld [vmem:[#allocation5 + $0x194] sm:$0xf]
        %v524 = vld [vmem:[#allocation5 + $0x198] sm:$0xf]
        %v525 = vld [vmem:[#allocation5 + $0x19c] sm:$0xf]
        %v526 = vld [vmem:[#allocation5 + $0x1a0] sm:$0xf]
        %v527 = vld [vmem:[#allocation5 + $0x1a4] sm:$0xf]
        %v528 = vld [vmem:[#allocation5 + $0x1a8] sm:$0xf]
        %v529 = vld [vmem:[#allocation5 + $0x1ac] sm:$0xf]
        %v530 = vld [vmem:[#allocation5 + $0x1b0] sm:$0xf]
        %v531 = vld [vmem:[#allocation5 + $0x1b4] sm:$0xf]
        %v532 = vld [vmem:[#allocation5 + $0x1b8] sm:$0xf]
        %v533 = vld [vmem:[#allocation5 + $0x1bc] sm:$0xf]
        %v550 = vunpack.c.l.b16 %v406
        %v551 = vunpack.c.h.b16 %v406
        %v552 = vunpack.c.l.b16 %v407
        %v553 = vunpack.c.h.b16 %v407
        %v554 = vunpack.c.l.b16 %v408
        %v555 = vunpack.c.h.b16 %v408
        %v556 = vunpack.c.l.b16 %v409
        %v557 = vunpack.c.l.b16 %v410
        %v558 = vunpack.c.h.b16 %v410
        %v559 = vunpack.c.l.b16 %v411
        %v560 = vunpack.c.h.b16 %v411
        %v561 = vunpack.c.l.b16 %v412
        %v562 = vunpack.c.h.b16 %v412
        %v563 = vunpack.c.l.b16 %v413
        %v564 = vunpack.c.l.b16 %v414
        %v565 = vunpack.c.h.b16 %v414
        %v566 = vunpack.c.l.b16 %v415
        %v567 = vunpack.c.h.b16 %v415
        %v568 = vunpack.c.l.b16 %v416
        %v569 = vunpack.c.h.b16 %v416
        %v570 = vunpack.c.l.b16 %v417
        %v571 = vunpack.c.l.b16 %v418
        %v572 = vunpack.c.h.b16 %v418
        %v573 = vunpack.c.l.b16 %v419
        %v574 = vunpack.c.h.b16 %v419
        %v575 = vunpack.c.l.b16 %v420
        %v576 = vunpack.c.h.b16 %v420
        %v577 = vunpack.c.l.b16 %v421
        %v578 = vpack.c.b16 %v557, %v550
        %v579 = vpack.c.b16 %v558, %v551
        %v580 = vpack.c.b16 %v559, %v552
        %v581 = vpack.c.b16 %v560, %v553
        %v582 = vpack.c.b16 %v561, %v554
        %v583 = vpack.c.b16 %v562, %v555
        %v584 = vpack.c.b16 %v563, %v556
        %v585 = vpack.c.b16 %v571, %v564
        %v586 = vpack.c.b16 %v572, %v565
        %v587 = vpack.c.b16 %v573, %v566
        %v588 = vpack.c.b16 %v574, %v567
        %v589 = vpack.c.b16 %v575, %v568
        %v590 = vpack.c.b16 %v576, %v569
        %v591 = vpack.c.b16 %v577, %v570
        %v718 = vunpack.c.l.b16 %v422
        %v719 = vunpack.c.l.b16 %v423
        %v720 = vunpack.c.l.b16 %v424
        %v721 = vunpack.c.l.b16 %v425
        %v722 = vunpack.c.l.b16 %v426
        %v723 = vunpack.c.l.b16 %v427
        %v724 = vunpack.c.l.b16 %v428
        %v725 = vunpack.c.l.b16 %v429
        %v726 = vunpack.c.l.b16 %v430
        %v727 = vunpack.c.l.b16 %v431
        %v728 = vunpack.c.l.b16 %v432
        %v729 = vunpack.c.l.b16 %v433
        %v730 = vunpack.c.l.b16 %v434
        %v731 = vunpack.c.l.b16 %v435
        %v732 = vunpack.c.l.b16 %v436
        %v733 = vunpack.c.l.b16 %v437
        %v734 = vunpack.c.l.b16 %v438
        %v735 = vunpack.c.l.b16 %v439
        %v736 = vunpack.c.l.b16 %v440
        %v737 = vunpack.c.l.b16 %v441
        %v738 = vunpack.c.l.b16 %v442
        %v739 = vunpack.c.l.b16 %v443
        %v740 = vunpack.c.l.b16 %v444
        %v741 = vunpack.c.l.b16 %v445
        %v742 = vunpack.c.l.b16 %v446
        %v743 = vunpack.c.l.b16 %v447
        %v744 = vunpack.c.l.b16 %v448
        %v745 = vunpack.c.l.b16 %v449
        %v746 = vunpack.c.l.b16 %v450
        %v747 = vunpack.c.l.b16 %v451
        %v748 = vunpack.c.l.b16 %v452
        %v749 = vunpack.c.l.b16 %v453
        %v750 = vunpack.c.l.b16 %v454
        %v751 = vunpack.c.l.b16 %v455
        %v752 = vunpack.c.l.b16 %v456
        %v753 = vunpack.c.l.b16 %v457
        %v754 = vunpack.c.l.b16 %v458
        %v755 = vunpack.c.l.b16 %v459
        %v756 = vunpack.c.l.b16 %v460
        %v757 = vunpack.c.l.b16 %v461
        %v758 = vunpack.c.l.b16 %v462
        %v759 = vunpack.c.l.b16 %v463
        %v760 = vunpack.c.l.b16 %v464
        %v761 = vunpack.c.l.b16 %v465
        %v762 = vunpack.c.l.b16 %v466
        %v763 = vunpack.c.l.b16 %v467
        %v764 = vunpack.c.l.b16 %v468
        %v765 = vunpack.c.l.b16 %v469
        %v766 = vunpack.c.l.b16 %v470
        %v767 = vunpack.c.l.b16 %v471
        %v768 = vunpack.c.l.b16 %v472
        %v769 = vunpack.c.l.b16 %v473
        %v770 = vunpack.c.l.b16 %v474
        %v771 = vunpack.c.l.b16 %v475
        %v772 = vunpack.c.l.b16 %v476
        %v773 = vunpack.c.l.b16 %v477
        %v774 = vunpack.c.l.b16 %v478
        %v775 = vunpack.c.l.b16 %v479
        %v776 = vunpack.c.l.b16 %v480
        %v777 = vunpack.c.l.b16 %v481
        %v778 = vunpack.c.l.b16 %v482
        %v779 = vunpack.c.l.b16 %v483
        %v780 = vunpack.c.l.b16 %v484
        %v781 = vunpack.c.l.b16 %v485
        %v782 = vunpack.c.l.b16 %v486
        %v783 = vunpack.c.l.b16 %v487
        %v784 = vunpack.c.l.b16 %v488
        %v785 = vunpack.c.l.b16 %v489
        %v786 = vunpack.c.l.b16 %v490
        %v787 = vunpack.c.l.b16 %v491
        %v788 = vunpack.c.l.b16 %v492
        %v789 = vunpack.c.l.b16 %v493
        %v790 = vunpack.c.l.b16 %v494
        %v791 = vunpack.c.l.b16 %v495
        %v792 = vunpack.c.l.b16 %v496
        %v793 = vunpack.c.l.b16 %v497
        %v794 = vunpack.c.l.b16 %v498
        %v795 = vunpack.c.l.b16 %v499
        %v796 = vunpack.c.l.b16 %v500
        %v797 = vunpack.c.l.b16 %v501
        %v798 = vunpack.c.l.b16 %v502
        %v799 = vunpack.c.l.b16 %v503
        %v800 = vunpack.c.l.b16 %v504
        %v801 = vunpack.c.l.b16 %v505
        %v802 = vunpack.c.l.b16 %v506
        %v803 = vunpack.c.l.b16 %v507
        %v804 = vunpack.c.l.b16 %v508
        %v805 = vunpack.c.l.b16 %v509
        %v806 = vunpack.c.l.b16 %v510
        %v807 = vunpack.c.l.b16 %v511
        %v808 = vunpack.c.l.b16 %v512
        %v809 = vunpack.c.l.b16 %v513
        %v810 = vunpack.c.l.b16 %v514
        %v811 = vunpack.c.l.b16 %v515
        %v812 = vunpack.c.l.b16 %v516
        %v813 = vunpack.c.l.b16 %v517
        %v814 = vunpack.c.l.b16 %v518
        %v815 = vunpack.c.l.b16 %v519
        %v816 = vunpack.c.l.b16 %v520
        %v817 = vunpack.c.l.b16 %v521
        %v818 = vunpack.c.l.b16 %v522
        %v819 = vunpack.c.l.b16 %v523
        %v820 = vunpack.c.l.b16 %v524
        %v821 = vunpack.c.l.b16 %v525
        %v822 = vunpack.c.l.b16 %v526
        %v823 = vunpack.c.l.b16 %v527
        %v824 = vunpack.c.l.b16 %v528
        %v825 = vunpack.c.l.b16 %v529
        %v826 = vunpack.c.l.b16 %v530
        %v827 = vunpack.c.l.b16 %v531
        %v828 = vunpack.c.l.b16 %v532
        %v829 = vunpack.c.l.b16 %v533
        %v830 = vpack.c.b16 %v719, %v718
        %v831 = vpack.c.b16 %v721, %v720
        %v832 = vpack.c.b16 %v723, %v722
        %v833 = vpack.c.b16 %v725, %v724
        %v834 = vpack.c.b16 %v727, %v726
        %v835 = vpack.c.b16 %v729, %v728
        %v836 = vpack.c.b16 %v731, %v730
        %v837 = vpack.c.b16 %v733, %v732
        %v838 = vpack.c.b16 %v735, %v734
        %v839 = vpack.c.b16 %v737, %v736
        %v840 = vpack.c.b16 %v739, %v738
        %v841 = vpack.c.b16 %v741, %v740
        %v842 = vpack.c.b16 %v743, %v742
        %v843 = vpack.c.b16 %v745, %v744
        %v844 = vpack.c.b16 %v747, %v746
        %v845 = vpack.c.b16 %v749, %v748
        %v846 = vpack.c.b16 %v751, %v750
        %v847 = vpack.c.b16 %v753, %v752
        %v848 = vpack.c.b16 %v755, %v754
        %v849 = vpack.c.b16 %v757, %v756
        %v850 = vpack.c.b16 %v759, %v758
        %v851 = vpack.c.b16 %v761, %v760
        %v852 = vpack.c.b16 %v763, %v762
        %v853 = vpack.c.b16 %v765, %v764
        %v854 = vpack.c.b16 %v767, %v766
        %v855 = vpack.c.b16 %v769, %v768
        %v856 = vpack.c.b16 %v771, %v770
        %v857 = vpack.c.b16 %v773, %v772
        %v858 = vpack.c.b16 %v775, %v774
        %v859 = vpack.c.b16 %v777, %v776
        %v860 = vpack.c.b16 %v779, %v778
        %v861 = vpack.c.b16 %v781, %v780
        %v862 = vpack.c.b16 %v783, %v782
        %v863 = vpack.c.b16 %v785, %v784
        %v864 = vpack.c.b16 %v787, %v786
        %v865 = vpack.c.b16 %v789, %v788
        %v866 = vpack.c.b16 %v791, %v790
        %v867 = vpack.c.b16 %v793, %v792
        %v868 = vpack.c.b16 %v795, %v794
        %v869 = vpack.c.b16 %v797, %v796
        %v870 = vpack.c.b16 %v799, %v798
        %v871 = vpack.c.b16 %v801, %v800
        %v872 = vpack.c.b16 %v803, %v802
        %v873 = vpack.c.b16 %v805, %v804
        %v874 = vpack.c.b16 %v807, %v806
        %v875 = vpack.c.b16 %v809, %v808
        %v876 = vpack.c.b16 %v811, %v810
        %v877 = vpack.c.b16 %v813, %v812
        %v878 = vpack.c.b16 %v815, %v814
        %v879 = vpack.c.b16 %v817, %v816
        %v880 = vpack.c.b16 %v819, %v818
        %v881 = vpack.c.b16 %v821, %v820
        %v882 = vpack.c.b16 %v823, %v822
        %v883 = vpack.c.b16 %v825, %v824
        %v884 = vpack.c.b16 %v827, %v826
        %v885 = vpack.c.b16 %v829, %v828
        %942 = vmatpush.bf16.msra.mxu0 %v837
        %943 = vmatpush.bf16.msra.mxu0 %v836
        %944 = vmatpush.bf16.msra.mxu0 %v835
        %945 = vmatpush.bf16.msra.mxu0 %v834
        %946 = vmatpush.bf16.msra.mxu0 %v833
        %947 = vmatpush.bf16.msra.mxu0 %v832
        %948 = vmatpush.bf16.msra.mxu0 %v831
        %949 = vmatpush.bf16.msra.mxu0 %v830
        %950 = vmatmul.bf16.gmra.mxu0 %v578
        %v951 = vpop.f32.mrf.mxu0
        %v952 = vadd.f32 0.0, %v951
        %v953 = vpop.f32.mrf.mxu0
        %v954 = vadd.f32 0.0, %v953
        %955 = vmatmul.bf16.gmra.mxu0 %v585
        %v956 = vpop.f32.mrf.mxu0
        %v957 = vadd.f32 0.0, %v956
        %v958 = vpop.f32.mrf.mxu0
        %v959 = vadd.f32 0.0, %v958
        %960 = vdwg.mxu0
        %961 = vmatpush.bf16.msra.mxu0 %v845
        %962 = vmatpush.bf16.msra.mxu0 %v844
        %963 = vmatpush.bf16.msra.mxu0 %v843
        %964 = vmatpush.bf16.msra.mxu0 %v842
        %965 = vmatpush.bf16.msra.mxu0 %v841
        %966 = vmatpush.bf16.msra.mxu0 %v840
        %967 = vmatpush.bf16.msra.mxu0 %v839
        %968 = vmatpush.bf16.msra.mxu0 %v838
        %969 = vmatmul.bf16.gmra.mxu0 %v579
        %v970 = vpop.f32.mrf.mxu0
        %v971 = vadd.f32 %v952, %v970
        %v972 = vpop.f32.mrf.mxu0
        %v973 = vadd.f32 %v954, %v972
        %974 = vmatmul.bf16.gmra.mxu0 %v586
        %v975 = vpop.f32.mrf.mxu0
        %v976 = vadd.f32 %v957, %v975
        %v977 = vpop.f32.mrf.mxu0
        %v978 = vadd.f32 %v959, %v977
        %979 = vdwg.mxu0
        %980 = vmatpush.bf16.msra.mxu0 %v853
        %981 = vmatpush.bf16.msra.mxu0 %v852
        %982 = vmatpush.bf16.msra.mxu0 %v851
        %983 = vmatpush.bf16.msra.mxu0 %v850
        %984 = vmatpush.bf16.msra.mxu0 %v849
        %985 = vmatpush.bf16.msra.mxu0 %v848
        %986 = vmatpush.bf16.msra.mxu0 %v847
        %987 = vmatpush.bf16.msra.mxu0 %v846
        %988 = vmatmul.bf16.gmra.mxu0 %v580
        %v989 = vpop.f32.mrf.mxu0
        %v990 = vadd.f32 %v971, %v989
        %v991 = vpop.f32.mrf.mxu0
        %v992 = vadd.f32 %v973, %v991
        %993 = vmatmul.bf16.gmra.mxu0 %v587
        %v994 = vpop.f32.mrf.mxu0
        %v995 = vadd.f32 %v976, %v994
        %v996 = vpop.f32.mrf.mxu0
        %v997 = vadd.f32 %v978, %v996
        %998 = vdwg.mxu0
        %999 = vmatpush.bf16.msra.mxu0 %v861
        %1000 = vmatpush.bf16.msra.mxu0 %v860
        %1001 = vmatpush.bf16.msra.mxu0 %v859
        %1002 = vmatpush.bf16.msra.mxu0 %v858
        %1003 = vmatpush.bf16.msra.mxu0 %v857
        %1004 = vmatpush.bf16.msra.mxu0 %v856
        %1005 = vmatpush.bf16.msra.mxu0 %v855
        %1006 = vmatpush.bf16.msra.mxu0 %v854
        %1007 = vmatmul.bf16.gmra.mxu0 %v581
        %v1008 = vpop.f32.mrf.mxu0
        %v1009 = vadd.f32 %v990, %v1008
        %v1010 = vpop.f32.mrf.mxu0
        %v1011 = vadd.f32 %v992, %v1010
        %1012 = vmatmul.bf16.gmra.mxu0 %v588
        %v1013 = vpop.f32.mrf.mxu0
        %v1014 = vadd.f32 %v995, %v1013
        %v1015 = vpop.f32.mrf.mxu0
        %v1016 = vadd.f32 %v997, %v1015
        %1017 = vdwg.mxu0
        %1018 = vmatpush.bf16.msra.mxu0 %v869
        %1019 = vmatpush.bf16.msra.mxu0 %v868
        %1020 = vmatpush.bf16.msra.mxu0 %v867
        %1021 = vmatpush.bf16.msra.mxu0 %v866
        %1022 = vmatpush.bf16.msra.mxu0 %v865
        %1023 = vmatpush.bf16.msra.mxu0 %v864
        %1024 = vmatpush.bf16.msra.mxu0 %v863
        %1025 = vmatpush.bf16.msra.mxu0 %v862
        %1026 = vmatmul.bf16.gmra.mxu0 %v582
        %v1027 = vpop.f32.mrf.mxu0
        %v1028 = vadd.f32 %v1009, %v1027
        %v1029 = vpop.f32.mrf.mxu0
        %v1030 = vadd.f32 %v1011, %v1029
        %1031 = vmatmul.bf16.gmra.mxu0 %v589
        %v1032 = vpop.f32.mrf.mxu0
        %v1033 = vadd.f32 %v1014, %v1032
        %v1034 = vpop.f32.mrf.mxu0
        %v1035 = vadd.f32 %v1016, %v1034
        %1036 = vdwg.mxu0
        %1037 = vmatpush.bf16.msra.mxu0 %v877
        %1038 = vmatpush.bf16.msra.mxu0 %v876
        %1039 = vmatpush.bf16.msra.mxu0 %v875
        %1040 = vmatpush.bf16.msra.mxu0 %v874
        %1041 = vmatpush.bf16.msra.mxu0 %v873
        %1042 = vmatpush.bf16.msra.mxu0 %v872
        %1043 = vmatpush.bf16.msra.mxu0 %v871
        %1044 = vmatpush.bf16.msra.mxu0 %v870
        %1045 = vmatmul.bf16.gmra.mxu0 %v583
        %v1046 = vpop.f32.mrf.mxu0
        %v1047 = vadd.f32 %v1028, %v1046
        %v1048 = vpop.f32.mrf.mxu0
        %v1049 = vadd.f32 %v1030, %v1048
        %1050 = vmatmul.bf16.gmra.mxu0 %v590
        %v1051 = vpop.f32.mrf.mxu0
        %v1052 = vadd.f32 %v1033, %v1051
        %v1053 = vpop.f32.mrf.mxu0
        %v1054 = vadd.f32 %v1035, %v1053
        %1055 = vdwg.mxu0
        %1056 = vmatpush.bf16.msra.mxu0 %v885
        %1057 = vmatpush.bf16.msra.mxu0 %v884
        %1058 = vmatpush.bf16.msra.mxu0 %v883
        %1059 = vmatpush.bf16.msra.mxu0 %v882
        %1060 = vmatpush.bf16.msra.mxu0 %v881
        %1061 = vmatpush.bf16.msra.mxu0 %v880
        %1062 = vmatpush.bf16.msra.mxu0 %v879
        %1063 = vmatpush.bf16.msra.mxu0 %v878
        %1064 = vmatmul.bf16.gmra.mxu0 %v584
        %v1065 = vpop.f32.mrf.mxu0
        %v1066 = vadd.f32 %v1047, %v1065
        %v1067 = vpop.f32.mrf.mxu0
        %v1068 = vadd.f32 %v1049, %v1067
        %1069 = vmatmul.bf16.gmra.mxu0 %v591
        %v1070 = vpop.f32.mrf.mxu0
        %v1071 = vadd.f32 %v1052, %v1070
        %v1072 = vpop.f32.mrf.mxu0
        %v1073 = vadd.f32 %v1054, %v1072
        %1074 = vdwg.mxu0
        %v1075 = vld [vmem:[%s2] sm:$0x1]
        %v1076 = vld [vmem:[%s3] sm:$0x1]
        %v1077 = vmul.f32 %v1066, %v1066
        %v1078 = vmul.f32 %v1068, %v1068
        %v1079 = vmul.f32 %v1071, %v1071
        %v1080 = vmul.f32 %v1073, %v1073
        %v1081 = vadd.f32 %v1066, %v1068
        %v1082 = vadd.f32 %v1081, %v1071
        %v1083 = vadd.f32 %v1082, %v1073
        %v1084 = vrot.slane %v1083, 4
        %v1085 = vadd.f32 %v1083, %v1084
        %v1086 = vrot.slane %v1085, 2
        %v1087 = vadd.f32 %v1085, %v1086
        %v1088 = vrot.slane %v1087, 1
        %v1089 = vadd.f32 %v1087, %v1088
        %v1090 = vadd.f32 %v1077, %v1078
        %v1091 = vadd.f32 %v1090, %v1079
        %v1092 = vadd.f32 %v1091, %v1080
        %v1093 = vrot.slane %v1092, 4
        %v1094 = vadd.f32 %v1092, %v1093
        %v1095 = vrot.slane %v1094, 2
        %v1096 = vadd.f32 %v1094, %v1095
        %v1097 = vrot.slane %v1096, 1
        %v1098 = vadd.f32 %v1096, %v1097
        %v1099 = vrcp.pop 32.0
        %v1100 = vmul.f32 32.0, %v1099
        %v1101 = vsub.f32 1.0, %v1100
        %v1102 = vmul.f32 %v1099, %v1101
        %v1103 = vadd.f32 %v1099, %v1102
        %vm1104 = vweird.f32 %v1099
        %v1105 = vsel %vm1104, %v1099, %v1103
        %v1106 = vmul.f32 %v1089, %v1105
        %v1107 = vmul.f32 %v1098, %v1105
        %v1108 = vmul.f32 %v1106, %v1106
        %v1109 = vsub.f32 %v1107, %v1108
        %v1110 = vmax.f32 %v1109, 0.0
        %v1111 = vadd.f32 %v1110, 1e-05
        %v1112 = vrsqrt.pop %v1111
        %v1113 = vmul.f32 %v1112, %v1111
        %v1114 = vmul.f32 %v1113, %v1112
        %v1115 = vmul.f32 0.5, %v1114
        %v1116 = vsub.f32 1.5, %v1115
        %v1117 = vmul.f32 %v1112, %v1116
        %vm1118 = vweird.f32 %v1111
        %vm1119 = vweird.f32 %v1112
        %vm1120 = vmor %vm1118, %vm1119
        %v1121 = vsel %vm1120, %v1112, %v1117
        %v1122 = vmul.f32 %v1075, %v1121
        %v1123 = vmul.f32 %v1106, %v1122
        %v1124 = vsub.f32 %v1076, %v1123
        %v1126 = vperm.slane %v1122, 0
        %v1128 = vmul.f32 %v1066, %v1126
        %v1129 = vmul.f32 %v1068, %v1126
        %v1130 = vmul.f32 %v1071, %v1126
        %v1131 = vmul.f32 %v1073, %v1126
        %v1133 = vperm.slane %v1124, 0
        %v1135 = vadd.f32 %v1128, %v1133
        %v1136 = vadd.f32 %v1129, %v1133
        %v1137 = vadd.f32 %v1130, %v1133
        %v1138 = vadd.f32 %v1131, %v1133
        %v1139 = vmax.f32 %v1135, 0.0
        %v1140 = vmax.f32 %v1136, 0.0
        %v1141 = vmax.f32 %v1137, 0.0
        %v1142 = vmax.f32 %v1138, 0.0
        %v1143 = vpack.c.bf16 %v1140, %v1139
        %v1144 = vpack.c.bf16 %v1142, %v1141
        %v1145 = vld [vmem:[#allocation7] sm:$0xf]
        %v1146 = vld [vmem:[#allocation7 + $0x4] sm:$0xf]
        %v1147 = vld [vmem:[#allocation7 + $0x8] sm:$0xf]
        %v1148 = vld [vmem:[#allocation7 + $0xc] sm:$0xf]
        %v1149 = vld [vmem:[#allocation7 + $0x10] sm:$0xf]
        %v1150 = vld [vmem:[#allocation7 + $0x14] sm:$0xf]
        %v1151 = vld [vmem:[#allocation7 + $0x18] sm:$0xf]
        %v1152 = vld [vmem:[#allocation7 + $0x1c] sm:$0xf]
        %v1153 = vld [vmem:[#allocation7 + $0x20] sm:$0xf]
        %v1154 = vld [vmem:[#allocation7 + $0x24] sm:$0xf]
        %v1155 = vld [vmem:[#allocation7 + $0x28] sm:$0xf]
        %v1156 = vld [vmem:[#allocation7 + $0x2c] sm:$0xf]
        %v1157 = vld [vmem:[#allocation7 + $0x30] sm:$0xf]
        %v1158 = vld [vmem:[#allocation7 + $0x34] sm:$0xf]
        %v1159 = vld [vmem:[#allocation7 + $0x38] sm:$0xf]
        %v1160 = vld [vmem:[#allocation7 + $0x3c] sm:$0xf]
        %v1177 = vunpack.c.l.b16 %v1145
        %v1178 = vunpack.c.l.b16 %v1146
        %v1179 = vunpack.c.l.b16 %v1147
        %v1180 = vunpack.c.l.b16 %v1148
        %v1181 = vunpack.c.l.b16 %v1149
        %v1182 = vunpack.c.l.b16 %v1150
        %v1183 = vunpack.c.l.b16 %v1151
        %v1184 = vunpack.c.l.b16 %v1152
        %v1185 = vunpack.c.l.b16 %v1153
        %v1186 = vunpack.c.l.b16 %v1154
        %v1187 = vunpack.c.l.b16 %v1155
        %v1188 = vunpack.c.l.b16 %v1156
        %v1189 = vunpack.c.l.b16 %v1157
        %v1190 = vunpack.c.l.b16 %v1158
        %v1191 = vunpack.c.l.b16 %v1159
        %v1192 = vunpack.c.l.b16 %v1160
        %v1193 = vpack.c.b16 %v1178, %v1177
        %v1194 = vpack.c.b16 %v1180, %v1179
        %v1195 = vpack.c.b16 %v1182, %v1181
        %v1196 = vpack.c.b16 %v1184, %v1183
        %v1197 = vpack.c.b16 %v1186, %v1185
        %v1198 = vpack.c.b16 %v1188, %v1187
        %v1199 = vpack.c.b16 %v1190, %v1189
        %v1200 = vpack.c.b16 %v1192, %v1191
        %1209 = vmatpush.bf16.msra.mxu0 %v1200
        %1210 = vmatpush.bf16.msra.mxu0 %v1199
        %1211 = vmatpush.bf16.msra.mxu0 %v1198
        %1212 = vmatpush.bf16.msra.mxu0 %v1197
        %1213 = vmatpush.bf16.msra.mxu0 %v1196
        %1214 = vmatpush.bf16.msra.mxu0 %v1195
        %1215 = vmatpush.bf16.msra.mxu0 %v1194
        %1216 = vmatpush.bf16.msra.mxu0 %v1193
        %1217 = vmatmul.bf16.gmra.mxu0 %v1143
        %v1218 = vpop.f32.mrf.mxu0
        %v1219 = vadd.f32 0.0, %v1218
        %v1220 = vpop.f32.mrf.mxu0
        %v1221 = vadd.f32 0.0, %v1220
        %1222 = vmatmul.bf16.gmra.mxu0 %v1144
        %v1223 = vpop.f32.mrf.mxu0
        %v1224 = vadd.f32 0.0, %v1223
        %v1225 = vpop.f32.mrf.mxu0
        %v1226 = vadd.f32 0.0, %v1225
        %1227 = vdwg.mxu0
        %v1228 = vld [vmem:[%s5] sm:$0x1]
        %v1229 = vld [vmem:[%s6] sm:$0x1]
        %v1230 = vmul.f32 %v1219, %v1219
        %v1231 = vmul.f32 %v1221, %v1221
        %v1232 = vmul.f32 %v1224, %v1224
        %v1233 = vmul.f32 %v1226, %v1226
        %v1234 = vadd.f32 %v1219, %v1221
        %v1235 = vadd.f32 %v1234, %v1224
        %v1236 = vadd.f32 %v1235, %v1226
        %v1237 = vrot.slane %v1236, 4
        %v1238 = vadd.f32 %v1236, %v1237
        %v1239 = vrot.slane %v1238, 2
        %v1240 = vadd.f32 %v1238, %v1239
        %v1241 = vrot.slane %v1240, 1
        %v1242 = vadd.f32 %v1240, %v1241
        %v1243 = vadd.f32 %v1230, %v1231
        %v1244 = vadd.f32 %v1243, %v1232
        %v1245 = vadd.f32 %v1244, %v1233
        %v1246 = vrot.slane %v1245, 4
        %v1247 = vadd.f32 %v1245, %v1246
        %v1248 = vrot.slane %v1247, 2
        %v1249 = vadd.f32 %v1247, %v1248
        %v1250 = vrot.slane %v1249, 1
        %v1251 = vadd.f32 %v1249, %v1250
        %v1252 = vmul.f32 %v1242, %v1105
        %v1253 = vmul.f32 %v1251, %v1105
        %v1254 = vmul.f32 %v1252, %v1252
        %v1255 = vsub.f32 %v1253, %v1254
        %v1256 = vmax.f32 %v1255, 0.0
        %v1257 = vadd.f32 %v1256, 1e-05
        %v1258 = vrsqrt.pop %v1257
        %v1259 = vmul.f32 %v1258, %v1257
        %v1260 = vmul.f32 %v1259, %v1258
        %v1261 = vmul.f32 0.5, %v1260
        %v1262 = vsub.f32 1.5, %v1261
        %v1263 = vmul.f32 %v1258, %v1262
        %vm1264 = vweird.f32 %v1257
        %vm1265 = vweird.f32 %v1258
        %vm1266 = vmor %vm1264, %vm1265
        %v1267 = vsel %vm1266, %v1258, %v1263
        %v1268 = vmul.f32 %v1228, %v1267
        %v1269 = vmul.f32 %v1252, %v1268
        %v1270 = vsub.f32 %v1229, %v1269
        %v1272 = vperm.slane %v1268, 0
        %v1274 = vmul.f32 %v1219, %v1272
        %v1275 = vmul.f32 %v1221, %v1272
        %v1276 = vmul.f32 %v1224, %v1272
        %v1277 = vmul.f32 %v1226, %v1272
        %v1279 = vperm.slane %v1270, 0
        %v1281 = vadd.f32 %v1274, %v1279
        %v1282 = vadd.f32 %v1275, %v1279
        %v1283 = vadd.f32 %v1276, %v1279
        %v1284 = vadd.f32 %v1277, %v1279
        %v1285 = vmax.f32 %v1281, 0.0
        %v1286 = vmax.f32 %v1282, 0.0
        %v1287 = vmax.f32 %v1283, 0.0
        %v1288 = vmax.f32 %v1284, 0.0
        %v1289 = vpack.c.bf16 %v1286, %v1285
        %v1290 = vpack.c.bf16 %v1288, %v1287
        %v1291 = vld [vmem:[#allocation8] sm:$0xf]
        %v1292 = vld [vmem:[#allocation8 + $0x4] sm:$0xf]
        %v1293 = vld [vmem:[#allocation8 + $0x8] sm:$0xf]
        %v1294 = vld [vmem:[#allocation8 + $0xc] sm:$0xf]
        %v1295 = vld [vmem:[#allocation8 + $0x10] sm:$0xf]
        %v1296 = vld [vmem:[#allocation8 + $0x14] sm:$0xf]
        %v1297 = vld [vmem:[#allocation8 + $0x18] sm:$0xf]
        %v1298 = vld [vmem:[#allocation8 + $0x1c] sm:$0xf]
        %v1299 = vld [vmem:[#allocation8 + $0x20] sm:$0xf]
        %v1300 = vld [vmem:[#allocation8 + $0x24] sm:$0xf]
        %v1301 = vld [vmem:[#allocation8 + $0x28] sm:$0xf]
        %v1302 = vld [vmem:[#allocation8 + $0x2c] sm:$0xf]
        %v1303 = vld [vmem:[#allocation8 + $0x30] sm:$0xf]
        %v1304 = vld [vmem:[#allocation8 + $0x34] sm:$0xf]
        %v1305 = vld [vmem:[#allocation8 + $0x38] sm:$0xf]
        %v1306 = vld [vmem:[#allocation8 + $0x3c] sm:$0xf]
        %v1307 = vld [vmem:[%s8] sm:$0x1]
        %v1309 = vperm.slane %v1307, 0
        %v1327 = vunpack.c.l.b16 %v1291
        %v1328 = vunpack.c.l.b16 %v1292
        %v1329 = vunpack.c.l.b16 %v1293
        %v1330 = vunpack.c.l.b16 %v1294
        %v1331 = vunpack.c.l.b16 %v1295
        %v1332 = vunpack.c.l.b16 %v1296
        %v1333 = vunpack.c.l.b16 %v1297
        %v1334 = vunpack.c.l.b16 %v1298
        %v1335 = vunpack.c.l.b16 %v1299
        %v1336 = vunpack.c.l.b16 %v1300
        %v1337 = vunpack.c.l.b16 %v1301
        %v1338 = vunpack.c.l.b16 %v1302
        %v1339 = vunpack.c.l.b16 %v1303
        %v1340 = vunpack.c.l.b16 %v1304
        %v1341 = vunpack.c.l.b16 %v1305
        %v1342 = vunpack.c.l.b16 %v1306
        %v1343 = vpack.c.b16 %v1328, %v1327
        %v1344 = vpack.c.b16 %v1330, %v1329
        %v1345 = vpack.c.b16 %v1332, %v1331
        %v1346 = vpack.c.b16 %v1334, %v1333
        %v1347 = vpack.c.b16 %v1336, %v1335
        %v1348 = vpack.c.b16 %v1338, %v1337
        %v1349 = vpack.c.b16 %v1340, %v1339
        %v1350 = vpack.c.b16 %v1342, %v1341
        %1359 = vmatpush.bf16.msra.mxu0 %v1350
        %1360 = vmatpush.bf16.msra.mxu0 %v1349
        %1361 = vmatpush.bf16.msra.mxu0 %v1348
        %1362 = vmatpush.bf16.msra.mxu0 %v1347
        %1363 = vmatpush.bf16.msra.mxu0 %v1346
        %1364 = vmatpush.bf16.msra.mxu0 %v1345
        %1365 = vmatpush.bf16.msra.mxu0 %v1344
        %1366 = vmatpush.bf16.msra.mxu0 %v1343
        %1367 = vmatmul.bf16.gmra.mxu0 %v1289
        %v1368 = vpop.f32.mrf.mxu0
        %v1369 = vadd.f32 %v1309, %v1368
        %v1370 = vpop.f32.mrf.mxu0
        %v1371 = vadd.f32 %v1309, %v1370
        %1372 = vmatmul.bf16.gmra.mxu0 %v1290
        %v1373 = vpop.f32.mrf.mxu0
        %v1374 = vadd.f32 %v1309, %v1373
        %v1375 = vpop.f32.mrf.mxu0
        %v1376 = vadd.f32 %v1309, %v1375
        %1377 = vdwg.mxu0
        %1378 = vst [vmem:[%s403] sm:$0xff] %v1369
        %1379 = vst [vmem:[%s403 + $0x8] sm:$0xff] %v1371
        %1380 = vst [vmem:[%s403 + $0x10] sm:$0xff] %v1374
        %1381 = vst [vmem:[%s403 + $0x18] sm:$0xff] %v1376
        %s1382 = sand.u32 %s230, 1
        %s1383 = scalar_lea.sflag [#allocation4], %s1382
        %s1384 = sand.u32 %s230, 1
        %s1385 = smul.addr %s1384, 32
        %s1386 = scalar_lea.vmem [#allocation10], %s1385
        // Predicated region
        $region73: #{tpu_custom_call.1} parent=55 // pred_check
          %p1387 = pneg %p240
        $region74: #{tpu_custom_call.1} parent=55 // pred_check_branch
          %1389 = sbr.rel (%p1387) target = $region76
        $region75: #{tpu_custom_call.1} parent=55 // pred_region
          %s1390 = smul.u32 4, %s28
          %1392 = vsyncadd %s1383, 0
          %s1393 = smul.addr %s1390, 8
          %s1394 = scalar_lea.hbm %s9, %s1393
          %s1395 = sshll.u32 %s1386, 4
          %s1396 = int_to_ptr.vmem [resolvable:$true] %s1395
          %s1397 = sshll.u32 %s1394, 4
          %s1398 = int_to_ptr.hbm [resolvable:$true] %s1397
          %1403 = dma.vmem_to_hbm [thread:$0]  %s1396, 512, %s1398, %s1383, 128, 128, 8
        $region76: #{tpu_custom_call.1} parent=55 // pred_fallthru
          _
      $region56: #{tpu_custom_call.1} parent=5 // pred_fallthru
        _
      %p1404 = scmp.le.s32.totalorder 2, %s23
      // Predicated region
      $region77: #{tpu_custom_call.1} parent=5 // pred_check
        %p1405 = pneg %p1404
      $region78: #{tpu_custom_call.1} parent=5 // pred_check_branch
        %1407 = sbr.rel (%p1405) target = $region80
      $region79: #{tpu_custom_call.1} parent=5 // pred_region
        %s1408 = ssub.s32 %s23, 2
        // Predicated region
        $region81: #{tpu_custom_call.1} parent=79 // pred_check
          %p1409 = pneg %p246
        $region82: #{tpu_custom_call.1} parent=79 // pred_check_branch
          %1411 = sbr.rel (%p1409) target = $region84
        $region83: #{tpu_custom_call.1} parent=79 // pred_region
          %s1412 = sand.u32 %s231, 1
          %s1413 = scalar_lea.sflag [#allocation4], %s1412
          %s1414 = sand.u32 %s231, 1
          %s1415 = smul.addr %s1414, 32
          %s1416 = scalar_lea.vmem [#allocation10], %s1415
          %1418 = dma.done %s1413, 512
        $region84: #{tpu_custom_call.1} parent=79 // pred_fallthru
          _
      $region80: #{tpu_custom_call.1} parent=5 // pred_fallthru
        _
    $region6: #{tpu_custom_call.1} parent=1 // loop_footer
      %s27 = sadd.s32 1, %s23
    $region7: #{tpu_custom_call.1} parent=1 // loop_footer_branch
      %22 = sbr.rel target = $region3
    $region8: #{tpu_custom_call.1} parent=1 // loop_exit
      _
    %1419 = vsyncpa [#allocation3], 1
    %s1420 = scalar_lea.sflag [#allocation3], 1
    %1421 = vsyncpa %s1420, 1
    %1422 = vsyncpa [#allocation6], 1
    %1423 = vsyncpa [#allocation9], 1
    %1424 = vsyncpa [#allocation4], 1
    %s1425 = scalar_lea.sflag [#allocation4], 1
    %1426 = vsyncpa %s1425, 1

</llo_original>
